<compile_context>
chip_gen: v7x
topology: tpu7x:2x2x1
jax: 0.10.0
libtpu: 0.0.40
codegen_flags: <defaults>
</compile_context>

<pallas_src>
import functools

import jax
import jax.numpy as jnp
from jax import lax
from jax.experimental import pallas as pl
from jax.experimental.pallas import tpu as pltpu


def _round_up(x, m):
    return (x + m - 1) // m * m


# --------------------------------------------------------------------------
# Kernels
# --------------------------------------------------------------------------
def _mlp_resident_kernel(x_ref, gamma_ref, beta_ref, w1_ref, b1_ref, w2_ref,
                         b2_ref, o_ref, *, inv_d):
    """Weights fully resident in VMEM; 1-D grid over row tiles."""
    x = x_ref[...].astype(jnp.float32)
    # Single-pass LayerNorm stats.  Zero-padded columns of x don't perturb the
    # sums because we divide by the real D (inv_d), and gamma/beta are padded
    # with zeros so padded xn columns are exactly 0.
    mean = jnp.sum(x, axis=-1, keepdims=True) * inv_d
    ex2 = jnp.sum(x * x, axis=-1, keepdims=True) * inv_d
    var = ex2 - mean * mean
    xn = (x - mean) * lax.rsqrt(var + 1e-5)            # rsqrt -> EUP slot
    xn = xn * gamma_ref[...] + beta_ref[...]

    h = jnp.dot(xn.astype(jnp.bfloat16), w1_ref[...],
                preferred_element_type=jnp.float32)
    h = jnp.maximum(h + b1_ref[...], 0.0)
    # Dropout: eval-mode identity.
    y = jnp.dot(h.astype(jnp.bfloat16), w2_ref[...],
                preferred_element_type=jnp.float32)
    o_ref[...] = (y + b2_ref[...] + x).astype(o_ref.dtype)


def _mlp_tiled_kernel(x_ref, gamma_ref, beta_ref, w1_ref, b1_ref, w2_ref,
                      b2_ref, o_ref, xn_ref, acc_ref, *, inv_d):
    """Hidden dim tiled on grid axis 1; f32 accumulator in VMEM scratch."""
    k = pl.program_id(1)

    @pl.when(k == 0)
    def _():
        x = x_ref[...].astype(jnp.float32)
        mean = jnp.sum(x, axis=-1, keepdims=True) * inv_d
        ex2 = jnp.sum(x * x, axis=-1, keepdims=True) * inv_d
        var = ex2 - mean * mean
        xn = (x - mean) * lax.rsqrt(var + 1e-5)
        xn = xn * gamma_ref[...] + beta_ref[...]
        xn_ref[...] = xn.astype(xn_ref.dtype)           # bf16, resident over k
        acc_ref[...] = jnp.zeros_like(acc_ref)

    h = jnp.dot(xn_ref[...], w1_ref[...], preferred_element_type=jnp.float32)
    h = jnp.maximum(h + b1_ref[...], 0.0)
    # Dropout: eval-mode identity.
    acc_ref[...] += jnp.dot(h.astype(w2_ref.dtype), w2_ref[...],
                            preferred_element_type=jnp.float32)

    @pl.when(k == pl.num_programs(1) - 1)
    def _():
        y = acc_ref[...] + b2_ref[...] + x_ref[...].astype(jnp.float32)
        o_ref[...] = y.astype(o_ref.dtype)


# --------------------------------------------------------------------------
# Wrapper
# --------------------------------------------------------------------------
def _vmem_capacity_bytes():
    cap = 64 << 20  # conservative fallback: safe on v7x (64 MiB physical)
    try:
        info = pltpu.get_tpu_info()
        cap = int(getattr(info, "vmem_capacity_bytes", cap)) or cap
    except Exception:
        pass
    return cap


def mlp_forward(x, gamma, beta, w1, b1, w2, b2, *,
                tm=None, th=None, force_path=None):
    """x: (..., D). Weights stored as (in, out) (== torch weight.T).
    Returns the same shape/dtype as x."""
    orig_shape = x.shape
    D = orig_shape[-1]
    H = w1.shape[1]
    x2 = x.reshape(-1, D)
    N = x2.shape[0]

    Dp = _round_up(D, 128)                 # lane-dense input/output columns
    xb = x2.dtype.itemsize
    ob = xb

    cap = _vmem_capacity_bytes()
    budget = int(cap * 0.80)

    # Row tile: multiple of 8; cap at ceil(N/2) so the parallel row axis has
    # >= 2 tiles (v7x megacore) whenever N > 8.
    N8 = _round_up(N, 8)
    tm_cap = _round_up(-(-N8 // 2), 8)
    base_tms = [1024, 768, 512, 384, 256, 192, 128, 96, 64, 32, 16, 8]
    tm_cands = sorted({max(8, min(t, tm_cap)) for t in base_tms}, reverse=True)
    if tm is not None:
        tm_cands = [max(8, min(_round_up(tm, 8), tm_cap))]

    Hp_res = _round_up(H, 128)

    # Conservative footprints (count everything double-buffered so the
    # non-Buffered fallback still fits).
    def resident_bytes(tm_):
        w = 2 * (Dp * Hp_res + Hp_res * Dp) * 2
        io = 2 * tm_ * Dp * xb + 2 * tm_ * Dp * ob
        params = 2 * (3 * Dp + Hp_res) * 4
        inter = tm_ * Hp_res * 4 + 3 * tm_ * Dp * 4
        return w + io + params + inter

    def tiled_bytes(tm_, th_):
        w = 2 * (Dp * th_ + th_ * Dp) * 2
        io = 2 * tm_ * Dp * xb + 2 * tm_ * Dp * ob
        params = 2 * (3 * Dp + th_) * 4
        scratch = tm_ * Dp * (2 + 4)
        inter = tm_ * th_ * 4 + 2 * tm_ * Dp * 4
        return w + io + params + scratch + inter

    choice = None
    if force_path != "tiled":
        for tm_ in tm_cands:
            if resident_bytes(tm_) <= budget:
                choice = ("resident", tm_, Hp_res)
                break
        if choice is None and force_path == "resident":
            choice = ("resident", tm_cands[-1], Hp_res)
    if choice is None and force_path != "resident":
        # th candidates are 256-multiples (2x256x256 MXU on v6e/v7x); 128 is a
        # last resort (and fine on v5e's 4x128x128 MXU).
        base_ths = [2048, 1024, 768, 512, 256, 128] if th is None else [th]
        for tm_ in tm_cands:
            for th_ in base_ths:
                th_e = max(128, min(_round_up(th_, 128), Hp_res))
                if tiled_bytes(tm_, th_e) <= budget:
                    choice = ("tiled", tm_, th_e)
                    break
            if choice is not None:
                break
    if choice is None:
        choice = ("tiled", tm_cands[-1], 128)   # let the compiler cope

    mode, tm_eff, th_eff = choice
    Np = _round_up(N, tm_eff)
    Hp = Hp_res if mode == "resident" else _round_up(H, th_eff)
    kgrid = 1 if mode == "resident" else Hp // th_eff

    # ---- pad & cast operands (zero pads are exact: zero w1 columns / w2 rows
    # contribute 0 through relu+dot; padded D columns are zeroed by gamma/beta
    # padding; padded output columns/rows are sliced off). ----
    x2 = jnp.pad(x2, ((0, Np - N), (0, Dp - D)))
    gammaf = jnp.pad(gamma.reshape(1, D).astype(jnp.float32),
                     ((0, 0), (0, Dp - D)))
    betaf = jnp.pad(beta.reshape(1, D).astype(jnp.float32),
                    ((0, 0), (0, Dp - D)))
    w1b = jnp.pad(w1.astype(jnp.bfloat16), ((0, Dp - D), (0, Hp - H)))
    b1f = jnp.pad(b1.reshape(1, H).astype(jnp.float32), ((0, 0), (0, Hp - H)))
    w2b = jnp.pad(w2.astype(jnp.bfloat16), ((0, Hp - H), (0, Dp - D)))
    b2f = jnp.pad(b2.reshape(1, D).astype(jnp.float32), ((0, 0), (0, Dp - D)))

    footprint = (resident_bytes(tm_eff) if mode == "resident"
                 else tiled_bytes(tm_eff, th_eff))
    vmem_limit = int(min(int(cap * 0.92), max(int(footprint * 1.5), 32 << 20)))

    inv_d = float(1.0 / D)
    args = (x2, gammaf, betaf, w1b, b1f, w2b, b2f)

    def run(use_single_buffer):
        def spec(shape, index_map, invariant):
            if invariant and use_single_buffer:
                return pl.BlockSpec(shape, index_map,
                                    pipeline_mode=pl.Buffered(1))
            return pl.BlockSpec(shape, index_map)

        if mode == "resident":
            grid = (Np // tm_eff,)
            in_specs = [
                spec((tm_eff, Dp), lambda i: (i, 0), False),   # x rows
                spec((1, Dp), lambda i: (0, 0), True),          # gamma
                spec((1, Dp), lambda i: (0, 0), True),          # beta
                spec((Dp, Hp), lambda i: (0, 0), True),          # w1 (resident)
                spec((1, Hp), lambda i: (0, 0), True),           # b1
                spec((Hp, Dp), lambda i: (0, 0), True),          # w2 (resident)
                spec((1, Dp), lambda i: (0, 0), True),           # b2
            ]
            out_spec = pl.BlockSpec((tm_eff, Dp), lambda i: (i, 0))
            scratch = []
            kern = functools.partial(_mlp_resident_kernel, inv_d=inv_d)
            dims = ("parallel",)
        else:
            grid = (Np // tm_eff, kgrid)
            in_specs = [
                spec((tm_eff, Dp), lambda i, k: (i, 0), False),  # x rows
                spec((1, Dp), lambda i, k: (0, 0), True),         # gamma
                spec((1, Dp), lambda i, k: (0, 0), True),         # beta
                spec((Dp, th_eff), lambda i, k: (0, k), False),   # w1 tile
                spec((1, th_eff), lambda i, k: (0, k), False),    # b1 tile
                spec((th_eff, Dp), lambda i, k: (k, 0), False),   # w2 tile
                spec((1, Dp), lambda i, k: (0, 0), True),         # b2
            ]
            out_spec = pl.BlockSpec((tm_eff, Dp), lambda i, k: (i, 0))
            scratch = [pltpu.VMEM((tm_eff, Dp), jnp.bfloat16),    # xn over k
                       pltpu.VMEM((tm_eff, Dp), jnp.float32)]     # f32 acc
            kern = functools.partial(_mlp_tiled_kernel, inv_d=inv_d)
            dims = ("parallel", "arbitrary")

        return pl.pallas_call(
            kern,
            out_shape=jax.ShapeDtypeStruct((Np, Dp), x.dtype),
            grid_spec=pltpu.PrefetchScalarGridSpec(
                num_scalar_prefetch=0,
                grid=grid,
                in_specs=in_specs,
                out_specs=out_spec,
                scratch_shapes=scratch),
            compiler_params=pltpu.CompilerParams(
                dimension_semantics=dims,
                vmem_limit_bytes=vmem_limit),
        )(*args)

    if hasattr(pl, "Buffered"):
        try:
            out = run(True)
        except Exception:
            out = run(False)   # older JAX / unsupported pipeline_mode
    else:
        out = run(False)

    return out[:N, :D].reshape(orig_shape)


# --------------------------------------------------------------------------
# Self-test
# --------------------------------------------------------------------------
if __name__ == "__main__":
    # Small shapes consistent with the module.  D is a multiple of 128 for
    # clean lane tiling; S and H deliberately do NOT align to tiles so the
    # row-padding and hidden-reduction paths are both exercised.
    B, S, D, H = 2, 7, 256, 384

    key = jax.random.PRNGKey(0)
    kx, kg, kb, kw1, kb1, kw2, kb2 = jax.random.split(key, 7)

    x = jax.random.normal(kx, (B, S, D), dtype=jnp.float32)
    gamma = (jnp.ones((D,), jnp.float32)
             + 0.01 * jax.random.normal(kg, (D,), jnp.float32))
    beta = 0.01 * jax.random.normal(kb, (D,), jnp.float32)
    # Linear params stored as (in, out)  (== torch weight.T).
    w1 = jax.random.normal(kw1, (D, H), jnp.float32) * (1.0 / jnp.sqrt(D))
    b1 = 0.01 * jax.random.normal(kb1, (H,), jnp.float32)
    w2 = jax.random.normal(kw2, (H, D), jnp.float32) * (1.0 / jnp.sqrt(H))
    b2 = 0.01 * jax.random.normal(kb2, (D,), jnp.float32)

    # --- references ---
    xf = x.reshape(-1, D)
    mean = jnp.mean(xf, axis=-1, keepdims=True)
    var = jnp.mean((xf - mean) ** 2, axis=-1, keepdims=True)
    xn = (xf - mean) * lax.rsqrt(var + 1e-5) * gamma + beta
    bf = lambda a: a.astype(jnp.bfloat16).astype(jnp.float32)
    h_bf = jnp.maximum(bf(xn) @ bf(w1) + b1, 0.0)
    ref_bf = (bf(h_bf) @ bf(w2) + b2 + xf).reshape(B, S, D)
    h = jnp.maximum(xn @ w1 + b1, 0.0)
    ref_f32 = (h @ w2 + b2 + xf).reshape(B, S, D)

    # (1) auto path — weights-resident for these sizes.
    out = mlp_forward(x, gamma, beta, w1, b1, w2, b2)
    jax.block_until_ready(out)
    assert out.shape == x.shape and out.dtype == x.dtype
    assert jnp.allclose(out, ref_bf, atol=1e-2, rtol=1e-2), \
        "resident path: mismatch vs bf16-emulating reference"
    assert jnp.allclose(out, ref_f32, atol=5e-2, rtol=5e-2), \
        "resident path: mismatch vs f32 reference"

    # (2) forced tiled-hidden path — exercises the k-reduction + accumulator.
    out_t = mlp_forward(x, gamma, beta, w1, b1, w2, b2,
                        force_path="tiled", th=128)
    jax.block_until_ready(out_t)
    assert jnp.allclose(out_t, ref_bf, atol=1e-2, rtol=1e-2), \
        "tiled path: mismatch vs bf16-emulating reference"
    assert jnp.allclose(out_t, ref_f32, atol=5e-2, rtol=5e-2), \
        "tiled path: mismatch vs f32 reference"

    print("KERNEL_OK")
</pallas_src>

<mosaic_0001>
module attributes {stable_mosaic.version = 11 : i64} {
  func.func @_mlp_resident_kernel(%arg0: i32, %arg1: memref<8x256xf32, #tpu.memory_space<vmem>>, %arg2: memref<1x256xf32, #tpu.memory_space<vmem>>, %arg3: memref<1x256xf32, #tpu.memory_space<vmem>>, %arg4: memref<256x384xbf16, #tpu.memory_space<vmem>>, %arg5: memref<1x384xf32, #tpu.memory_space<vmem>>, %arg6: memref<384x256xbf16, #tpu.memory_space<vmem>>, %arg7: memref<1x256xf32, #tpu.memory_space<vmem>>, %arg8: memref<8x256xf32, #tpu.memory_space<vmem>>) attributes {dimension_semantics = [#tpu.dimension_semantics<parallel>], iteration_bounds = array<i64: 2>, scalar_prefetch = 0 : i64, scratch_operands = 0 : i64, tpu.core_type = #tpu.core_type<tc>, window_params = [{transform_indices = @transform_0, window_bounds = array<i64: 8, 256>}, {pipeline_mode = #tpu.pipeline_mode<synchronous>, transform_indices = @transform_1, window_bounds = array<i64: 1, 256>}, {pipeline_mode = #tpu.pipeline_mode<synchronous>, transform_indices = @transform_2, window_bounds = array<i64: 1, 256>}, {pipeline_mode = #tpu.pipeline_mode<synchronous>, transform_indices = @transform_3, window_bounds = array<i64: 256, 384>}, {pipeline_mode = #tpu.pipeline_mode<synchronous>, transform_indices = @transform_4, window_bounds = array<i64: 1, 384>}, {pipeline_mode = #tpu.pipeline_mode<synchronous>, transform_indices = @transform_5, window_bounds = array<i64: 384, 256>}, {pipeline_mode = #tpu.pipeline_mode<synchronous>, transform_indices = @transform_6, window_bounds = array<i64: 1, 256>}, {transform_indices = @transform_7, window_bounds = array<i64: 8, 256>}]} {
    %c0 = arith.constant 0 : index
    %c0_0 = arith.constant 0 : index
    %0 = vector.load %arg1[%c0, %c0_0] : memref<8x256xf32, #tpu.memory_space<vmem>>, vector<8x256xf32>
    %cst = arith.constant dense<0.000000e+00> : vector<8xf32>
    %1 = vector.multi_reduction <add>, %0, %cst [1] : vector<8x256xf32> to vector<8xf32>
    %2 = vector.shape_cast %1 : vector<8xf32> to vector<8x1xf32>
    %cst_1 = arith.constant 3.906250e-03 : f32
    %3 = vector.broadcast %cst_1 : f32 to vector<8x1xf32>
    %4 = arith.mulf %2, %3 : vector<8x1xf32>
    %5 = arith.mulf %0, %0 : vector<8x256xf32>
    %cst_2 = arith.constant dense<0.000000e+00> : vector<8xf32>
    %6 = vector.multi_reduction <add>, %5, %cst_2 [1] : vector<8x256xf32> to vector<8xf32>
    %7 = vector.shape_cast %6 : vector<8xf32> to vector<8x1xf32>
    %cst_3 = arith.constant 3.906250e-03 : f32
    %8 = vector.broadcast %cst_3 : f32 to vector<8x1xf32>
    %9 = arith.mulf %7, %8 : vector<8x1xf32>
    %10 = arith.mulf %4, %4 : vector<8x1xf32>
    %11 = arith.subf %9, %10 : vector<8x1xf32>
    %12 = vector.broadcast %4 : vector<8x1xf32> to vector<8x256xf32>
    %13 = arith.subf %0, %12 : vector<8x256xf32>
    %cst_4 = arith.constant 9.99999974E-6 : f32
    %14 = vector.broadcast %cst_4 : f32 to vector<8x1xf32>
    %15 = arith.addf %11, %14 : vector<8x1xf32>
    %16 = math.rsqrt %15 : vector<8x1xf32>
    %17 = vector.broadcast %16 : vector<8x1xf32> to vector<8x256xf32>
    %18 = arith.mulf %13, %17 : vector<8x256xf32>
    %c0_5 = arith.constant 0 : index
    %c0_6 = arith.constant 0 : index
    %19 = vector.load %arg2[%c0_5, %c0_6] : memref<1x256xf32, #tpu.memory_space<vmem>>, vector<1x256xf32>
    %20 = vector.broadcast %19 : vector<1x256xf32> to vector<8x256xf32>
    %21 = arith.mulf %18, %20 : vector<8x256xf32>
    %c0_7 = arith.constant 0 : index
    %c0_8 = arith.constant 0 : index
    %22 = vector.load %arg3[%c0_7, %c0_8] : memref<1x256xf32, #tpu.memory_space<vmem>>, vector<1x256xf32>
    %23 = vector.broadcast %22 : vector<1x256xf32> to vector<8x256xf32>
    %24 = arith.addf %21, %23 : vector<8x256xf32>
    %25 = arith.truncf %24 : vector<8x256xf32> to vector<8x256xbf16>
    %c0_9 = arith.constant 0 : index
    %c0_10 = arith.constant 0 : index
    %26 = vector.load %arg4[%c0_9, %c0_10] : memref<256x384xbf16, #tpu.memory_space<vmem>>, vector<256x384xbf16>
    %cst_11 = arith.constant dense<0.000000e+00> : vector<8x384xf32>
    %27 = tpu.matmul %25, %26, %cst_11 {dimension_numbers = #tpu.dot_dimension_numbers<[1], [0], [0], [1], [0, 0, 1, 1], [], []>} : vector<8x256xbf16>, vector<256x384xbf16>, vector<8x384xf32> -> vector<8x384xf32>
    %c0_12 = arith.constant 0 : index
    %c0_13 = arith.constant 0 : index
    %28 = vector.load %arg5[%c0_12, %c0_13] : memref<1x384xf32, #tpu.memory_space<vmem>>, vector<1x384xf32>
    %29 = vector.broadcast %28 : vector<1x384xf32> to vector<8x384xf32>
    %30 = arith.addf %27, %29 : vector<8x384xf32>
    %cst_14 = arith.constant 0.000000e+00 : f32
    %31 = vector.broadcast %cst_14 : f32 to vector<8x384xf32>
    %32 = arith.maximumf %30, %31 : vector<8x384xf32>
    %33 = arith.truncf %32 : vector<8x384xf32> to vector<8x384xbf16>
    %c0_15 = arith.constant 0 : index
    %c0_16 = arith.constant 0 : index
    %34 = vector.load %arg6[%c0_15, %c0_16] : memref<384x256xbf16, #tpu.memory_space<vmem>>, vector<384x256xbf16>
    %cst_17 = arith.constant dense<0.000000e+00> : vector<8x256xf32>
    %35 = tpu.matmul %33, %34, %cst_17 {dimension_numbers = #tpu.dot_dimension_numbers<[1], [0], [0], [1], [0, 0, 1, 1], [], []>} : vector<8x384xbf16>, vector<384x256xbf16>, vector<8x256xf32> -> vector<8x256xf32>
    %c0_18 = arith.constant 0 : index
    %c0_19 = arith.constant 0 : index
    %36 = vector.load %arg7[%c0_18, %c0_19] : memref<1x256xf32, #tpu.memory_space<vmem>>, vector<1x256xf32>
    %37 = vector.broadcast %36 : vector<1x256xf32> to vector<8x256xf32>
    %38 = arith.addf %35, %37 : vector<8x256xf32>
    %39 = arith.addf %38, %0 : vector<8x256xf32>
    %c0_20 = arith.constant 0 : index
    %c0_21 = arith.constant 0 : index
    %40 = vector.load %arg8[%c0_20, %c0_21] : memref<8x256xf32, #tpu.memory_space<vmem>>, vector<8x256xf32>
    tpu.vector_store %arg8[%c0_20, %c0_21], %39 {strides = array<i32>} : memref<8x256xf32, #tpu.memory_space<vmem>>, vector<8x256xf32>,
    return
  }
  func.func @transform_0(%arg0: i32) -> (i32, i32) {
    %c0_i32 = arith.constant 0 : i32
    %c0_i32_0 = arith.constant 0 : i32
    return %arg0, %c0_i32 : i32, i32
  }
  func.func @transform_1(%arg0: i32) -> (i32, i32) {
    %c0_i32 = arith.constant 0 : i32
    %c0_i32_0 = arith.constant 0 : i32
    %c0_i32_1 = arith.constant 0 : i32
    return %c0_i32, %c0_i32_0 : i32, i32
  }
  func.func @transform_2(%arg0: i32) -> (i32, i32) {
    %c0_i32 = arith.constant 0 : i32
    %c0_i32_0 = arith.constant 0 : i32
    %c0_i32_1 = arith.constant 0 : i32
    return %c0_i32, %c0_i32_0 : i32, i32
  }
  func.func @transform_3(%arg0: i32) -> (i32, i32) {
    %c0_i32 = arith.constant 0 : i32
    %c0_i32_0 = arith.constant 0 : i32
    %c0_i32_1 = arith.constant 0 : i32
    return %c0_i32, %c0_i32_0 : i32, i32
  }
  func.func @transform_4(%arg0: i32) -> (i32, i32) {
    %c0_i32 = arith.constant 0 : i32
    %c0_i32_0 = arith.constant 0 : i32
    %c0_i32_1 = arith.constant 0 : i32
    return %c0_i32, %c0_i32_0 : i32, i32
  }
  func.func @transform_5(%arg0: i32) -> (i32, i32) {
    %c0_i32 = arith.constant 0 : i32
    %c0_i32_0 = arith.constant 0 : i32
    %c0_i32_1 = arith.constant 0 : i32
    return %c0_i32, %c0_i32_0 : i32, i32
  }
  func.func @transform_6(%arg0: i32) -> (i32, i32) {
    %c0_i32 = arith.constant 0 : i32
    %c0_i32_0 = arith.constant 0 : i32
    %c0_i32_1 = arith.constant 0 : i32
    return %c0_i32, %c0_i32_0 : i32, i32
  }
  func.func @transform_7(%arg0: i32) -> (i32, i32) {
    %c0_i32 = arith.constant 0 : i32
    %c0_i32_0 = arith.constant 0 : i32
    return %arg0, %c0_i32 : i32, i32
  }
}

module attributes {stable_mosaic.version = 11 : i64} {
  func.func @_mlp_resident_kernel(%arg0: i32, %arg1: memref<8x256xf32, #tpu.memory_space<vmem>>, %arg2: memref<1x256xf32, #tpu.memory_space<vmem>>, %arg3: memref<1x256xf32, #tpu.memory_space<vmem>>, %arg4: memref<256x384xbf16, #tpu.memory_space<vmem>>, %arg5: memref<1x384xf32, #tpu.memory_space<vmem>>, %arg6: memref<384x256xbf16, #tpu.memory_space<vmem>>, %arg7: memref<1x256xf32, #tpu.memory_space<vmem>>, %arg8: memref<8x256xf32, #tpu.memory_space<vmem>>) attributes {dimension_semantics = [#tpu.dimension_semantics<parallel>], iteration_bounds = array<i64: 2>, scalar_prefetch = 0 : i64, scratch_operands = 0 : i64, tpu.core_type = #tpu.core_type<tc>, window_params = [{transform_indices = @transform_0, window_bounds = array<i64: 8, 256>}, {pipeline_mode = #tpu.pipeline_mode<synchronous>, transform_indices = @transform_1, window_bounds = array<i64: 1, 256>}, {pipeline_mode = #tpu.pipeline_mode<synchronous>, transform_indices = @transform_2, window_bounds = array<i64: 1, 256>}, {pipeline_mode = #tpu.pipeline_mode<synchronous>, transform_indices = @transform_3, window_bounds = array<i64: 256, 384>}, {pipeline_mode = #tpu.pipeline_mode<synchronous>, transform_indices = @transform_4, window_bounds = array<i64: 1, 384>}, {pipeline_mode = #tpu.pipeline_mode<synchronous>, transform_indices = @transform_5, window_bounds = array<i64: 384, 256>}, {pipeline_mode = #tpu.pipeline_mode<synchronous>, transform_indices = @transform_6, window_bounds = array<i64: 1, 256>}, {transform_indices = @transform_7, window_bounds = array<i64: 8, 256>}]} {
    %c0 = arith.constant 0 : index
    %c0_0 = arith.constant 0 : index
    %0 = vector.load %arg1[%c0, %c0_0] : memref<8x256xf32, #tpu.memory_space<vmem>>, vector<8x256xf32>
    %cst = arith.constant dense<0.000000e+00> : vector<8xf32>
    %1 = vector.multi_reduction <add>, %0, %cst [1] : vector<8x256xf32> to vector<8xf32>
    %2 = vector.shape_cast %1 : vector<8xf32> to vector<8x1xf32>
    %cst_1 = arith.constant 3.906250e-03 : f32
    %3 = vector.broadcast %cst_1 : f32 to vector<8x1xf32>
    %4 = arith.mulf %2, %3 : vector<8x1xf32>
    %5 = arith.mulf %0, %0 : vector<8x256xf32>
    %cst_2 = arith.constant dense<0.000000e+00> : vector<8xf32>
    %6 = vector.multi_reduction <add>, %5, %cst_2 [1] : vector<8x256xf32> to vector<8xf32>
    %7 = vector.shape_cast %6 : vector<8xf32> to vector<8x1xf32>
    %cst_3 = arith.constant 3.906250e-03 : f32
    %8 = vector.broadcast %cst_3 : f32 to vector<8x1xf32>
    %9 = arith.mulf %7, %8 : vector<8x1xf32>
    %10 = arith.mulf %4, %4 : vector<8x1xf32>
    %11 = arith.subf %9, %10 : vector<8x1xf32>
    %12 = vector.broadcast %4 : vector<8x1xf32> to vector<8x256xf32>
    %13 = arith.subf %0, %12 : vector<8x256xf32>
    %cst_4 = arith.constant 9.99999974E-6 : f32
    %14 = vector.broadcast %cst_4 : f32 to vector<8x1xf32>
    %15 = arith.addf %11, %14 : vector<8x1xf32>
    %16 = math.rsqrt %15 : vector<8x1xf32>
    %17 = vector.broadcast %16 : vector<8x1xf32> to vector<8x256xf32>
    %18 = arith.mulf %13, %17 : vector<8x256xf32>
    %c0_5 = arith.constant 0 : index
    %c0_6 = arith.constant 0 : index
    %19 = vector.load %arg2[%c0_5, %c0_6] : memref<1x256xf32, #tpu.memory_space<vmem>>, vector<1x256xf32>
    %20 = vector.broadcast %19 : vector<1x256xf32> to vector<8x256xf32>
    %21 = arith.mulf %18, %20 : vector<8x256xf32>
    %c0_7 = arith.constant 0 : index
    %c0_8 = arith.constant 0 : index
    %22 = vector.load %arg3[%c0_7, %c0_8] : memref<1x256xf32, #tpu.memory_space<vmem>>, vector<1x256xf32>
    %23 = vector.broadcast %22 : vector<1x256xf32> to vector<8x256xf32>
    %24 = arith.addf %21, %23 : vector<8x256xf32>
    %25 = arith.truncf %24 : vector<8x256xf32> to vector<8x256xbf16>
    %c0_9 = arith.constant 0 : index
    %c0_10 = arith.constant 0 : index
    %26 = vector.load %arg4[%c0_9, %c0_10] : memref<256x384xbf16, #tpu.memory_space<vmem>>, vector<256x384xbf16>
    %cst_11 = arith.constant dense<0.000000e+00> : vector<8x384xf32>
    %27 = tpu.matmul %25, %26, %cst_11 {dimension_numbers = #tpu.dot_dimension_numbers<[1], [0], [0], [1], [0, 0, 1, 1], [], []>} : vector<8x256xbf16>, vector<256x384xbf16>, vector<8x384xf32> -> vector<8x384xf32>
    %c0_12 = arith.constant 0 : index
    %c0_13 = arith.constant 0 : index
    %28 = vector.load %arg5[%c0_12, %c0_13] : memref<1x384xf32, #tpu.memory_space<vmem>>, vector<1x384xf32>
    %29 = vector.broadcast %28 : vector<1x384xf32> to vector<8x384xf32>
    %30 = arith.addf %27, %29 : vector<8x384xf32>
    %cst_14 = arith.constant 0.000000e+00 : f32
    %31 = vector.broadcast %cst_14 : f32 to vector<8x384xf32>
    %32 = arith.maximumf %30, %31 : vector<8x384xf32>
    %33 = arith.truncf %32 : vector<8x384xf32> to vector<8x384xbf16>
    %c0_15 = arith.constant 0 : index
    %c0_16 = arith.constant 0 : index
    %34 = vector.load %arg6[%c0_15, %c0_16] : memref<384x256xbf16, #tpu.memory_space<vmem>>, vector<384x256xbf16>
    %cst_17 = arith.constant dense<0.000000e+00> : vector<8x256xf32>
    %35 = tpu.matmul %33, %34, %cst_17 {dimension_numbers = #tpu.dot_dimension_numbers<[1], [0], [0], [1], [0, 0, 1, 1], [], []>} : vector<8x384xbf16>, vector<384x256xbf16>, vector<8x256xf32> -> vector<8x256xf32>
    %c0_18 = arith.constant 0 : index
    %c0_19 = arith.constant 0 : index
    %36 = vector.load %arg7[%c0_18, %c0_19] : memref<1x256xf32, #tpu.memory_space<vmem>>, vector<1x256xf32>
    %37 = vector.broadcast %36 : vector<1x256xf32> to vector<8x256xf32>
    %38 = arith.addf %35, %37 : vector<8x256xf32>
    %39 = arith.addf %38, %0 : vector<8x256xf32>
    %c0_20 = arith.constant 0 : index
    %c0_21 = arith.constant 0 : index
    %40 = vector.load %arg8[%c0_20, %c0_21] : memref<8x256xf32, #tpu.memory_space<vmem>>, vector<8x256xf32>
    tpu.vector_store %arg8[%c0_20, %c0_21], %39 {strides = array<i32>} : memref<8x256xf32, #tpu.memory_space<vmem>>, vector<8x256xf32>,
    return
  }
  func.func @transform_0(%arg0: i32) -> (i32, i32) {
    %c0_i32 = arith.constant 0 : i32
    %c0_i32_0 = arith.constant 0 : i32
    return %arg0, %c0_i32 : i32, i32
  }
  func.func @transform_1(%arg0: i32) -> (i32, i32) {
    %c0_i32 = arith.constant 0 : i32
    %c0_i32_0 = arith.constant 0 : i32
    %c0_i32_1 = arith.constant 0 : i32
    return %c0_i32, %c0_i32_0 : i32, i32
  }
  func.func @transform_2(%arg0: i32) -> (i32, i32) {
    %c0_i32 = arith.constant 0 : i32
    %c0_i32_0 = arith.constant 0 : i32
    %c0_i32_1 = arith.constant 0 : i32
    return %c0_i32, %c0_i32_0 : i32, i32
  }
  func.func @transform_3(%arg0: i32) -> (i32, i32) {
    %c0_i32 = arith.constant 0 : i32
    %c0_i32_0 = arith.constant 0 : i32
    %c0_i32_1 = arith.constant 0 : i32
    return %c0_i32, %c0_i32_0 : i32, i32
  }
  func.func @transform_4(%arg0: i32) -> (i32, i32) {
    %c0_i32 = arith.constant 0 : i32
    %c0_i32_0 = arith.constant 0 : i32
    %c0_i32_1 = arith.constant 0 : i32
    return %c0_i32, %c0_i32_0 : i32, i32
  }
  func.func @transform_5(%arg0: i32) -> (i32, i32) {
    %c0_i32 = arith.constant 0 : i32
    %c0_i32_0 = arith.constant 0 : i32
    %c0_i32_1 = arith.constant 0 : i32
    return %c0_i32, %c0_i32_0 : i32, i32
  }
  func.func @transform_6(%arg0: i32) -> (i32, i32) {
    %c0_i32 = arith.constant 0 : i32
    %c0_i32_0 = arith.constant 0 : i32
    %c0_i32_1 = arith.constant 0 : i32
    return %c0_i32, %c0_i32_0 : i32, i32
  }
  func.func @transform_7(%arg0: i32) -> (i32, i32) {
    %c0_i32 = arith.constant 0 : i32
    %c0_i32_0 = arith.constant 0 : i32
    return %arg0, %c0_i32 : i32, i32
  }
}

</mosaic_0001>

<llo_original>
// kernel: tpu_custom_call.1
$region0: #{tpu_custom_call.1}
  #allocation0 [shape = 'u32[]', space=smem, size = 0x4, offset = 0x4, fixed_abs, tag = 'smem constant byte address 0x4 - core index']
  #allocation1 [shape = 'u32[144,128]{1,0:T(1,128)}', space=vmem, size = 0x12000, scoped, tag = 'internal scratch']
  %s0 = inlined_call_operand.hbm [shape: f32[16,256], index: 0, kind: input, shape index: {}]
  %s1 = inlined_call_operand.vmem [shape: f32[1,256], index: 1, kind: input, shape index: {}]
  %s2 = inlined_call_operand.vmem [shape: f32[1,256], index: 2, kind: input, shape index: {}]
  %s3 = inlined_call_operand.hbm [shape: bf16[256,384], index: 3, kind: input, shape index: {}]
  %s4 = inlined_call_operand.vmem [shape: f32[1,384], index: 4, kind: input, shape index: {}]
  %s5 = inlined_call_operand.hbm [shape: bf16[384,256], index: 5, kind: input, shape index: {}]
  %s6 = inlined_call_operand.vmem [shape: f32[1,256], index: 6, kind: input, shape index: {}]
  %s7 = inlined_call_operand.hbm [shape: f32[16,256], index: 7, kind: output, shape index: {}]
  %s8 = sld [smem:[#allocation0]]
  $region73: #{tpu_custom_call.1} parent=0
    _
  %s10 = ssub.s32 1, %s8
  %s11 = scalar_select 0, %s10, %s8
  $region1: #{tpu_custom_call.1} parent=0
    #allocation2 [shape = 'u8[16384]{0}', space=vmem, size = 0x4000, scoped, tag = 'input window, operand 0']
    #allocation3 [shape = 's32[2]{0}', space=sflag, size = 0x8, scoped, tag = 'scoped memory for tpu_custom_call.1']
    #allocation4 [shape = 's32[2]{0}', space=sflag, size = 0x8, scoped, tag = 'scoped memory for tpu_custom_call.1']
    #allocation5 [shape = 'u8[196608]{0}', space=vmem, size = 0x30000, scoped, tag = 'input window, operand 3, single buffered']
    #allocation6 [shape = 's32[1]{0}', space=sflag, size = 0x4, scoped, tag = 'scoped memory for tpu_custom_call.1']
    #allocation7 [shape = 'u8[196608]{0}', space=vmem, size = 0x30000, scoped, tag = 'input window, operand 5, single buffered']
    #allocation8 [shape = 'u8[16384]{0}', space=vmem, size = 0x4000, scoped, tag = 'output window, operand 0']
    %12 = vsyncpa [#allocation3], 0
    %s13 = scalar_lea.sflag [#allocation3], 1
    %14 = vsyncpa %s13, 0
    %15 = vsyncpa [#allocation6], 0
    %16 = vsyncpa [#allocation4], 0
    %s17 = scalar_lea.sflag [#allocation4], 1
    %18 = vsyncpa %s17, 0
    loop: start=0, step=1, limit=4
    $region2: #{tpu_custom_call.1} parent=1 // loop_pre_header
      _
    $region3: #{tpu_custom_call.1} parent=1 // loop_header
      %s20 = sphi 0, %s24
      %p21 = scmp.ge.s32.totalorder %s20, 4
      %s30 = sphi 0, %s32
      %s33 = sphi 0, %s30
      %s34 = sphi 0, %s33
      %s50 = sphi 0, %s34
      %s54 = sphi 0, %s54
      %s56 = sphi 0, %s54
      %s57 = sphi 0, %s56
      %s71 = sphi 0, %s57
      %s75 = sphi 0, %s75
      %s77 = sphi 0, %s75
      %s78 = sphi 0, %s77
      %s92 = sphi 0, %s78
      %s96 = sphi 0, %s96
      %s98 = sphi 0, %s96
      %s99 = sphi 0, %s98
      %s113 = sphi 0, %s99
      %s117 = sphi 0, %s117
      %s119 = sphi 0, %s117
      %s120 = sphi 0, %s119
      %s134 = sphi 0, %s120
      %s138 = sphi 0, %s138
      %s140 = sphi 0, %s138
      %s141 = sphi 0, %s140
      %s155 = sphi 0, %s141
      %s159 = sphi 0, %s159
      %s161 = sphi 0, %s159
      %s162 = sphi 0, %s161
      %s176 = sphi 0, %s162
      %s182 = sphi 0, %s184
      %s185 = sphi 0, %s182
      %s186 = sphi 0, %s185
      %s202 = sphi 0, %s186
    $region4: #{tpu_custom_call.1} parent=1 // loop_header_branch
      %23 = sbr.rel (%p21) target = $region8
    $region5: #{tpu_custom_call.1} parent=1 // loop_body
      %s25 = ssub.s32 %s20, 1
      %s26 = ssub.s32 %s20, 2
      %s27 = sadd.s32 %s20, 1
      %s28 = ssub.s32 %s20, %s27
      %p29 = scmp.eq.s32.totalorder %s28, 0
      %s31 = sadd.s32 %s30, 1
      %s32 = scalar_select %p29, %s30, %s31
      %p35 = pneg %p29
      %p36 = scmp.eq.s32.totalorder %s20, 1
      %p37 = por %p35, %p36
      %p38 = scmp.ne.s32.totalorder %s30, %s33
      %p39 = scmp.eq.s32.totalorder %s20, 0
      %p40 = por %p38, %p39
      %p41 = scmp.ne.s32.totalorder %s30, %s33
      %p42 = scmp.eq.s32.totalorder %s25, 1
      %p43 = por %p41, %p42
      %p44 = scmp.ne.s32.totalorder %s33, %s34
      %p45 = scmp.eq.s32.totalorder %s25, 0
      %p46 = por %p44, %p45
      %p47 = scmp.ne.s32.totalorder %s33, %s34
      %p48 = scmp.eq.s32.totalorder %s26, 1
      %p49 = por %p47, %p48
      %p51 = scmp.ne.s32.totalorder %s34, %s50
      %p52 = scmp.eq.s32.totalorder %s26, 0
      %p53 = por %p51, %p52
      %s55 = sadd.s32 %s54, 1
      %p58 = scmp.eq.s32.totalorder %s20, 1
      %p59 = scmp.ne.s32.totalorder %s54, %s56
      %p60 = scmp.eq.s32.totalorder %s20, 0
      %p61 = por %p59, %p60
      %p62 = scmp.ne.s32.totalorder %s54, %s56
      %p63 = scmp.eq.s32.totalorder %s25, 1
      %p64 = por %p62, %p63
      %p65 = scmp.ne.s32.totalorder %s56, %s57
      %p66 = scmp.eq.s32.totalorder %s25, 0
      %p67 = por %p65, %p66
      %p68 = scmp.ne.s32.totalorder %s56, %s57
      %p69 = scmp.eq.s32.totalorder %s26, 1
      %p70 = por %p68, %p69
      %p72 = scmp.ne.s32.totalorder %s57, %s71
      %p73 = scmp.eq.s32.totalorder %s26, 0
      %p74 = por %p72, %p73
      %s76 = sadd.s32 %s75, 1
      %p79 = scmp.eq.s32.totalorder %s20, 1
      %p80 = scmp.ne.s32.totalorder %s75, %s77
      %p81 = scmp.eq.s32.totalorder %s20, 0
      %p82 = por %p80, %p81
      %p83 = scmp.ne.s32.totalorder %s75, %s77
      %p84 = scmp.eq.s32.totalorder %s25, 1
      %p85 = por %p83, %p84
      %p86 = scmp.ne.s32.totalorder %s77, %s78
      %p87 = scmp.eq.s32.totalorder %s25, 0
      %p88 = por %p86, %p87
      %p89 = scmp.ne.s32.totalorder %s77, %s78
      %p90 = scmp.eq.s32.totalorder %s26, 1
      %p91 = por %p89, %p90
      %p93 = scmp.ne.s32.totalorder %s78, %s92
      %p94 = scmp.eq.s32.totalorder %s26, 0
      %p95 = por %p93, %p94
      %s97 = sadd.s32 %s96, 1
      %p100 = scmp.eq.s32.totalorder %s20, 1
      %p101 = scmp.ne.s32.totalorder %s96, %s98
      %p102 = scmp.eq.s32.totalorder %s20, 0
      %p103 = por %p101, %p102
      %p104 = scmp.ne.s32.totalorder %s96, %s98
      %p105 = scmp.eq.s32.totalorder %s25, 1
      %p106 = por %p104, %p105
      %p107 = scmp.ne.s32.totalorder %s98, %s99
      %p108 = scmp.eq.s32.totalorder %s25, 0
      %p109 = por %p107, %p108
      %p110 = scmp.ne.s32.totalorder %s98, %s99
      %p111 = scmp.eq.s32.totalorder %s26, 1
      %p112 = por %p110, %p111
      %p114 = scmp.ne.s32.totalorder %s99, %s113
      %p115 = scmp.eq.s32.totalorder %s26, 0
      %p116 = por %p114, %p115
      %s118 = sadd.s32 %s117, 1
      %p121 = scmp.eq.s32.totalorder %s20, 1
      %p122 = scmp.ne.s32.totalorder %s117, %s119
      %p123 = scmp.eq.s32.totalorder %s20, 0
      %p124 = por %p122, %p123
      %p125 = scmp.ne.s32.totalorder %s117, %s119
      %p126 = scmp.eq.s32.totalorder %s25, 1
      %p127 = por %p125, %p126
      %p128 = scmp.ne.s32.totalorder %s119, %s120
      %p129 = scmp.eq.s32.totalorder %s25, 0
      %p130 = por %p128, %p129
      %p131 = scmp.ne.s32.totalorder %s119, %s120
      %p132 = scmp.eq.s32.totalorder %s26, 1
      %p133 = por %p131, %p132
      %p135 = scmp.ne.s32.totalorder %s120, %s134
      %p136 = scmp.eq.s32.totalorder %s26, 0
      %p137 = por %p135, %p136
      %s139 = sadd.s32 %s138, 1
      %p142 = scmp.eq.s32.totalorder %s20, 1
      %p143 = scmp.ne.s32.totalorder %s138, %s140
      %p144 = scmp.eq.s32.totalorder %s20, 0
      %p145 = por %p143, %p144
      %p146 = scmp.ne.s32.totalorder %s138, %s140
      %p147 = scmp.eq.s32.totalorder %s25, 1
      %p148 = por %p146, %p147
      %p149 = scmp.ne.s32.totalorder %s140, %s141
      %p150 = scmp.eq.s32.totalorder %s25, 0
      %p151 = por %p149, %p150
      %p152 = scmp.ne.s32.totalorder %s140, %s141
      %p153 = scmp.eq.s32.totalorder %s26, 1
      %p154 = por %p152, %p153
      %p156 = scmp.ne.s32.totalorder %s141, %s155
      %p157 = scmp.eq.s32.totalorder %s26, 0
      %p158 = por %p156, %p157
      %s160 = sadd.s32 %s159, 1
      %p163 = scmp.eq.s32.totalorder %s20, 1
      %p164 = scmp.ne.s32.totalorder %s159, %s161
      %p165 = scmp.eq.s32.totalorder %s20, 0
      %p166 = por %p164, %p165
      %p167 = scmp.ne.s32.totalorder %s159, %s161
      %p168 = scmp.eq.s32.totalorder %s25, 1
      %p169 = por %p167, %p168
      %p170 = scmp.ne.s32.totalorder %s161, %s162
      %p171 = scmp.eq.s32.totalorder %s25, 0
      %p172 = por %p170, %p171
      %p173 = scmp.ne.s32.totalorder %s161, %s162
      %p174 = scmp.eq.s32.totalorder %s26, 1
      %p175 = por %p173, %p174
      %p177 = scmp.ne.s32.totalorder %s162, %s176
      %p178 = scmp.eq.s32.totalorder %s26, 0
      %p179 = por %p177, %p178
      %s180 = ssub.s32 %s20, %s27
      %p181 = scmp.eq.s32.totalorder %s180, 0
      %s183 = sadd.s32 %s182, 1
      %s184 = scalar_select %p181, %s182, %s183
      %p187 = pneg %p181
      %p188 = scmp.eq.s32.totalorder %s20, 1
      %p189 = por %p187, %p188
      %p190 = scmp.ne.s32.totalorder %s182, %s185
      %p191 = scmp.eq.s32.totalorder %s20, 0
      %p192 = por %p190, %p191
      %p193 = scmp.ne.s32.totalorder %s182, %s185
      %p194 = scmp.eq.s32.totalorder %s25, 1
      %p195 = por %p193, %p194
      %p196 = scmp.ne.s32.totalorder %s185, %s186
      %p197 = scmp.eq.s32.totalorder %s25, 0
      %p198 = por %p196, %p197
      %p199 = scmp.ne.s32.totalorder %s185, %s186
      %p200 = scmp.eq.s32.totalorder %s26, 1
      %p201 = por %p199, %p200
      %p203 = scmp.ne.s32.totalorder %s186, %s202
      %p204 = scmp.eq.s32.totalorder %s26, 0
      %p205 = por %p203, %p204
      %p206 = scmp.le.s32.totalorder 1, %s20
      %p207 = scmp.lt.s32.totalorder %s20, 3
      %p208 = pnand %p206, %p207
      %p209 = pneg %p208
      // Predicated region
      $region9: #{tpu_custom_call.1} parent=5 // pred_check
        _
      $region10: #{tpu_custom_call.1} parent=5 // pred_check_branch
        %211 = sbr.rel (%p208) target = $region12
      $region11: #{tpu_custom_call.1} parent=5 // pred_region
        %s212 = ssub.s32 %s20, 1
        // Predicated region
        $region13: #{tpu_custom_call.1} parent=11 // pred_check
          %p213 = pneg %p67
        $region14: #{tpu_custom_call.1} parent=11 // pred_check_branch
          %215 = sbr.rel (%p213) target = $region16
        $region15: #{tpu_custom_call.1} parent=11 // pred_region
          _
        $region16: #{tpu_custom_call.1} parent=11 // pred_fallthru
          _
        // Predicated region
        $region17: #{tpu_custom_call.1} parent=11 // pred_check
          %p216 = pneg %p88
        $region18: #{tpu_custom_call.1} parent=11 // pred_check_branch
          %218 = sbr.rel (%p216) target = $region20
        $region19: #{tpu_custom_call.1} parent=11 // pred_region
          _
        $region20: #{tpu_custom_call.1} parent=11 // pred_fallthru
          _
        // Predicated region
        $region21: #{tpu_custom_call.1} parent=11 // pred_check
          %p219 = pneg %p109
        $region22: #{tpu_custom_call.1} parent=11 // pred_check_branch
          %221 = sbr.rel (%p219) target = $region24
        $region23: #{tpu_custom_call.1} parent=11 // pred_region
          %s223 = ssub.s32 6144, 6144
          %224 = vsyncadd [#allocation6], %s223
          %s225 = sshll.u32 [#allocation5], 4
          %s226 = int_to_ptr.vmem [resolvable:$true] %s225
          %231 = dma.hbm_to_vmem [thread:$0]  %s3, 6144, %s226, [#allocation6], 192, 192, 12
        $region24: #{tpu_custom_call.1} parent=11 // pred_fallthru
          _
        // Predicated region
        $region25: #{tpu_custom_call.1} parent=11 // pred_check
          %p232 = pneg %p130
        $region26: #{tpu_custom_call.1} parent=11 // pred_check_branch
          %234 = sbr.rel (%p232) target = $region28
        $region27: #{tpu_custom_call.1} parent=11 // pred_region
          _
        $region28: #{tpu_custom_call.1} parent=11 // pred_fallthru
          _
        // Predicated region
        $region29: #{tpu_custom_call.1} parent=11 // pred_check
          %p235 = pneg %p151
        $region30: #{tpu_custom_call.1} parent=11 // pred_check_branch
          %237 = sbr.rel (%p235) target = $region32
        $region31: #{tpu_custom_call.1} parent=11 // pred_region
          %s239 = ssub.s32 6144, 6144
          %240 = vsyncadd [#allocation6], %s239
          %s241 = sshll.u32 [#allocation7], 4
          %s242 = int_to_ptr.vmem [resolvable:$true] %s241
          %247 = dma.hbm_to_vmem [thread:$0]  %s5, 6144, %s242, [#allocation6], 128, 128, 8
        $region32: #{tpu_custom_call.1} parent=11 // pred_fallthru
          _
        // Predicated region
        $region33: #{tpu_custom_call.1} parent=11 // pred_check
          %p248 = pneg %p172
        $region34: #{tpu_custom_call.1} parent=11 // pred_check_branch
          %250 = sbr.rel (%p248) target = $region36
        $region35: #{tpu_custom_call.1} parent=11 // pred_region
          _
        $region36: #{tpu_custom_call.1} parent=11 // pred_fallthru
          _
      $region12: #{tpu_custom_call.1} parent=5 // pred_fallthru
        _
      %p251 = scmp.lt.s32.totalorder %s20, 2
      // Predicated region
      $region37: #{tpu_custom_call.1} parent=5 // pred_check
        %p252 = pneg %p251
      $region38: #{tpu_custom_call.1} parent=5 // pred_check_branch
        %254 = sbr.rel (%p252) target = $region40
      $region39: #{tpu_custom_call.1} parent=5 // pred_region
        // Predicated region
        $region41: #{tpu_custom_call.1} parent=39 // pred_check
          %p255 = pneg %p40
        $region42: #{tpu_custom_call.1} parent=39 // pred_check_branch
          %257 = sbr.rel (%p255) target = $region44
        $region43: #{tpu_custom_call.1} parent=39 // pred_region
          %s258 = sand.u32 %s30, 1
          %s259 = scalar_lea.sflag [#allocation3], %s258
          %s260 = sand.u32 %s30, 1
          %s261 = smul.addr %s260, 16
          %s262 = scalar_lea.vmem [#allocation2], %s261
          %s264 = ssub.s32 256, 256
          %265 = vsyncadd %s259, %s264
          %s266 = smul.addr %s20, 2
          %s267 = smul.addr %s266, 128
          %s268 = scalar_lea.hbm %s0, %s267
          %s270 = sshll.u32 %s262, 4
          %s271 = int_to_ptr.vmem [resolvable:$true] %s270
          %273 = dma.hbm_to_vmem [thread:$0]  %s268, 256, %s271, %s259
        $region44: #{tpu_custom_call.1} parent=39 // pred_fallthru
          _
      $region40: #{tpu_custom_call.1} parent=5 // pred_fallthru
        _
      %p274 = scmp.le.s32.totalorder 1, %s20
      %p275 = scmp.lt.s32.totalorder %s20, 3
      %p276 = pnand %p274, %p275
      %p277 = pneg %p276
      // Predicated region
      $region45: #{tpu_custom_call.1} parent=5 // pred_check
        _
      $region46: #{tpu_custom_call.1} parent=5 // pred_check_branch
        %279 = sbr.rel (%p276) target = $region48
      $region47: #{tpu_custom_call.1} parent=5 // pred_region
        %s280 = ssub.s32 %s20, 1
        %s281 = sand.u32 %s33, 1
        %s282 = scalar_lea.sflag [#allocation3], %s281
        %s283 = sand.u32 %s33, 1
        %s284 = smul.addr %s283, 16
        %s285 = scalar_lea.vmem [#allocation2], %s284
        // Predicated region
        $region49: #{tpu_custom_call.1} parent=47 // pred_check
          %p286 = pneg %p46
        $region50: #{tpu_custom_call.1} parent=47 // pred_check_branch
          %288 = sbr.rel (%p286) target = $region52
        $region51: #{tpu_custom_call.1} parent=47 // pred_region
          %289 = dma.done %s282, 256
        $region52: #{tpu_custom_call.1} parent=47 // pred_fallthru
          _
        // Predicated region
        $region53: #{tpu_custom_call.1} parent=47 // pred_check
          %p290 = pneg %p109
        $region54: #{tpu_custom_call.1} parent=47 // pred_check_branch
          %292 = sbr.rel (%p290) target = $region56
        $region55: #{tpu_custom_call.1} parent=47 // pred_region
          %293 = dma.done [#allocation6], 6144
        $region56: #{tpu_custom_call.1} parent=47 // pred_fallthru
          _
        // Predicated region
        $region57: #{tpu_custom_call.1} parent=47 // pred_check
          %p294 = pneg %p151
        $region58: #{tpu_custom_call.1} parent=47 // pred_check_branch
          %296 = sbr.rel (%p294) target = $region60
        $region59: #{tpu_custom_call.1} parent=47 // pred_region
          %297 = dma.done [#allocation6], 6144
        $region60: #{tpu_custom_call.1} parent=47 // pred_fallthru
          _
        %s298 = sand.u32 %s33, 1
        %s299 = scalar_lea.sflag [#allocation3], %s298
        %s300 = sand.u32 %s33, 1
        %s301 = smul.addr %s300, 16
        %s302 = scalar_lea.vmem [#allocation2], %s301
        %p303 = pneg %p46
        %p304 = pneg %p43
        %p305 = pneg %p67
        %p306 = pneg %p64
        %p307 = pneg %p88
        %p308 = pneg %p85
        %p309 = pneg %p109
        %p310 = pneg %p106
        %p311 = pneg %p130
        %p312 = pneg %p127
        %p313 = pneg %p151
        %p314 = pneg %p148
        %p315 = pneg %p172
        %p316 = pneg %p169
        %p317 = pneg %p198
        %p318 = pneg %p195
        %s319 = sand.u32 %s185, 1
        %s320 = scalar_lea.sflag [#allocation4], %s319
        %s321 = sand.u32 %s185, 1
        %s322 = smul.addr %s321, 16
        %s323 = scalar_lea.vmem [#allocation8], %s322
        %v325 = vld [vmem:[%s285] sm:$0xff]
        %v326 = vld [vmem:[%s285 + $0x8] sm:$0xff]
        %v327 = vadd.f32 %v325, %v326
        %328 = vadd.xlane.f32.xlu0 %v327
        %v329 = vpop.xlane.xlu0 %328
        %v330 = vmul.f32 %v329, 0.00390625
        %v331 = vmul.f32 %v325, %v325
        %v332 = vmul.f32 %v326, %v326
        %v333 = vadd.f32 %v331, %v332
        %334 = vadd.xlane.f32.xlu0 %v333
        %v335 = vpop.xlane.xlu0 %334
        %v336 = vmul.f32 %v335, 0.00390625
        %v337 = vmul.f32 %v330, %v330
        %v338 = vsub.f32 %v336, %v337
        %v339 = vsub.f32 %v325, %v330
        %v340 = vsub.f32 %v326, %v330
        %v341 = vadd.f32 %v338, 1e-05
        %v342 = vrsqrt.pop %v341
        %v343 = vmul.f32 %v339, %v342
        %v344 = vmul.f32 %v340, %v342
        %v345 = vld [vmem:[%s1] sm:$0x3]
        %v347 = vlaneseq
        %v348 = vshrl.u32 %v347, 7
        %v349 = vsub.s32 0, %v348
        %v350 = vrot.slane %v345, %v349
        %v351 = vlaneseq
        %v352 = vshrl.u32 %v351, 7
        %v353 = vsub.s32 1, %v352
        %v354 = vrot.slane %v345, %v353
        %v357 = vmul.f32 %v343, %v350
        %v358 = vmul.f32 %v344, %v354
        %v359 = vld [vmem:[%s2] sm:$0x3]
        %v361 = vlaneseq
        %v362 = vshrl.u32 %v361, 7
        %v363 = vsub.s32 0, %v362
        %v364 = vrot.slane %v359, %v363
        %v365 = vlaneseq
        %v366 = vshrl.u32 %v365, 7
        %v367 = vsub.s32 1, %v366
        %v368 = vrot.slane %v359, %v367
        %v371 = vadd.f32 %v357, %v364
        %v372 = vadd.f32 %v358, %v368
        %v373 = vpack.c.bf16 %v371, %v371
        %v374 = vpack.c.bf16 %v372, %v372
        %v375 = vld [vmem:[#allocation5] sm:$0xff]
        %v376 = vld [vmem:[#allocation5 + $0x8] sm:$0xf]
        %v377 = vld [vmem:[#allocation5 + $0xc] sm:$0xff]
        %v378 = vld [vmem:[#allocation5 + $0x14] sm:$0xf]
        %v379 = vld [vmem:[#allocation5 + $0x18] sm:$0xff]
        %v380 = vld [vmem:[#allocation5 + $0x20] sm:$0xf]
        %v381 = vld [vmem:[#allocation5 + $0x24] sm:$0xff]
        %v382 = vld [vmem:[#allocation5 + $0x2c] sm:$0xf]
        %v383 = vld [vmem:[#allocation5 + $0x30] sm:$0xff]
        %v384 = vld [vmem:[#allocation5 + $0x38] sm:$0xf]
        %v385 = vld [vmem:[#allocation5 + $0x3c] sm:$0xff]
        %v386 = vld [vmem:[#allocation5 + $0x44] sm:$0xf]
        %v387 = vld [vmem:[#allocation5 + $0x48] sm:$0xff]
        %v388 = vld [vmem:[#allocation5 + $0x50] sm:$0xf]
        %v389 = vld [vmem:[#allocation5 + $0x54] sm:$0xff]
        %v390 = vld [vmem:[#allocation5 + $0x5c] sm:$0xf]
        %v391 = vld [vmem:[#allocation5 + $0x60] sm:$0xff]
        %v392 = vld [vmem:[#allocation5 + $0x68] sm:$0xf]
        %v393 = vld [vmem:[#allocation5 + $0x6c] sm:$0xff]
        %v394 = vld [vmem:[#allocation5 + $0x74] sm:$0xf]
        %v395 = vld [vmem:[#allocation5 + $0x78] sm:$0xff]
        %v396 = vld [vmem:[#allocation5 + $0x80] sm:$0xf]
        %v397 = vld [vmem:[#allocation5 + $0x84] sm:$0xff]
        %v398 = vld [vmem:[#allocation5 + $0x8c] sm:$0xf]
        %v399 = vld [vmem:[#allocation5 + $0x90] sm:$0xff]
        %v400 = vld [vmem:[#allocation5 + $0x98] sm:$0xf]
        %v401 = vld [vmem:[#allocation5 + $0x9c] sm:$0xff]
        %v402 = vld [vmem:[#allocation5 + $0xa4] sm:$0xf]
        %v403 = vld [vmem:[#allocation5 + $0xa8] sm:$0xff]
        %v404 = vld [vmem:[#allocation5 + $0xb0] sm:$0xf]
        %v405 = vld [vmem:[#allocation5 + $0xb4] sm:$0xff]
        %v406 = vld [vmem:[#allocation5 + $0xbc] sm:$0xf]
        %v407 = vld [vmem:[#allocation5 + $0xc0] sm:$0xff]
        %v408 = vld [vmem:[#allocation5 + $0xc8] sm:$0xf]
        %v409 = vld [vmem:[#allocation5 + $0xcc] sm:$0xff]
        %v410 = vld [vmem:[#allocation5 + $0xd4] sm:$0xf]
        %v411 = vld [vmem:[#allocation5 + $0xd8] sm:$0xff]
        %v412 = vld [vmem:[#allocation5 + $0xe0] sm:$0xf]
        %v413 = vld [vmem:[#allocation5 + $0xe4] sm:$0xff]
        %v414 = vld [vmem:[#allocation5 + $0xec] sm:$0xf]
        %v415 = vld [vmem:[#allocation5 + $0xf0] sm:$0xff]
        %v416 = vld [vmem:[#allocation5 + $0xf8] sm:$0xf]
        %v417 = vld [vmem:[#allocation5 + $0xfc] sm:$0xff]
        %v418 = vld [vmem:[#allocation5 + $0x104] sm:$0xf]
        %v419 = vld [vmem:[#allocation5 + $0x108] sm:$0xff]
        %v420 = vld [vmem:[#allocation5 + $0x110] sm:$0xf]
        %v421 = vld [vmem:[#allocation5 + $0x114] sm:$0xff]
        %v422 = vld [vmem:[#allocation5 + $0x11c] sm:$0xf]
        %v423 = vld [vmem:[#allocation5 + $0x120] sm:$0xff]
        %v424 = vld [vmem:[#allocation5 + $0x128] sm:$0xf]
        %v425 = vld [vmem:[#allocation5 + $0x12c] sm:$0xff]
        %v426 = vld [vmem:[#allocation5 + $0x134] sm:$0xf]
        %v427 = vld [vmem:[#allocation5 + $0x138] sm:$0xff]
        %v428 = vld [vmem:[#allocation5 + $0x140] sm:$0xf]
        %v429 = vld [vmem:[#allocation5 + $0x144] sm:$0xff]
        %v430 = vld [vmem:[#allocation5 + $0x14c] sm:$0xf]
        %v431 = vld [vmem:[#allocation5 + $0x150] sm:$0xff]
        %v432 = vld [vmem:[#allocation5 + $0x158] sm:$0xf]
        %v433 = vld [vmem:[#allocation5 + $0x15c] sm:$0xff]
        %v434 = vld [vmem:[#allocation5 + $0x164] sm:$0xf]
        %v435 = vld [vmem:[#allocation5 + $0x168] sm:$0xff]
        %v436 = vld [vmem:[#allocation5 + $0x170] sm:$0xf]
        %v437 = vld [vmem:[#allocation5 + $0x174] sm:$0xff]
        %v438 = vld [vmem:[#allocation5 + $0x17c] sm:$0xf]
        %v439 = vld [vmem:[%s4] sm:$0x7]
        %v441 = vlaneseq
        %v442 = vshrl.u32 %v441, 7
        %v443 = vsub.s32 0, %v442
        %v444 = vrot.slane %v439, %v443
        %v445 = vlaneseq
        %v446 = vshrl.u32 %v445, 7
        %v447 = vsub.s32 1, %v446
        %v448 = vrot.slane %v439, %v447
        %v449 = vlaneseq
        %v450 = vshrl.u32 %v449, 7
        %v451 = vsub.s32 2, %v450
        %v452 = vrot.slane %v439, %v451
        %v520 = vunpack.c.l.b16 %v375
        %v521 = vunpack.c.h.b16 %v375
        %v522 = vunpack.c.l.b16 %v376
        %v523 = vunpack.c.l.b16 %v377
        %v524 = vunpack.c.h.b16 %v377
        %v525 = vunpack.c.l.b16 %v378
        %v526 = vunpack.c.l.b16 %v379
        %v527 = vunpack.c.h.b16 %v379
        %v528 = vunpack.c.l.b16 %v380
        %v529 = vunpack.c.l.b16 %v381
        %v530 = vunpack.c.h.b16 %v381
        %v531 = vunpack.c.l.b16 %v382
        %v532 = vunpack.c.l.b16 %v383
        %v533 = vunpack.c.h.b16 %v383
        %v534 = vunpack.c.l.b16 %v384
        %v535 = vunpack.c.l.b16 %v385
        %v536 = vunpack.c.h.b16 %v385
        %v537 = vunpack.c.l.b16 %v386
        %v538 = vunpack.c.l.b16 %v387
        %v539 = vunpack.c.h.b16 %v387
        %v540 = vunpack.c.l.b16 %v388
        %v541 = vunpack.c.l.b16 %v389
        %v542 = vunpack.c.h.b16 %v389
        %v543 = vunpack.c.l.b16 %v390
        %v544 = vunpack.c.l.b16 %v391
        %v545 = vunpack.c.h.b16 %v391
        %v546 = vunpack.c.l.b16 %v392
        %v547 = vunpack.c.l.b16 %v393
        %v548 = vunpack.c.h.b16 %v393
        %v549 = vunpack.c.l.b16 %v394
        %v550 = vunpack.c.l.b16 %v395
        %v551 = vunpack.c.h.b16 %v395
        %v552 = vunpack.c.l.b16 %v396
        %v553 = vunpack.c.l.b16 %v397
        %v554 = vunpack.c.h.b16 %v397
        %v555 = vunpack.c.l.b16 %v398
        %v556 = vunpack.c.l.b16 %v399
        %v557 = vunpack.c.h.b16 %v399
        %v558 = vunpack.c.l.b16 %v400
        %v559 = vunpack.c.l.b16 %v401
        %v560 = vunpack.c.h.b16 %v401
        %v561 = vunpack.c.l.b16 %v402
        %v562 = vunpack.c.l.b16 %v403
        %v563 = vunpack.c.h.b16 %v403
        %v564 = vunpack.c.l.b16 %v404
        %v565 = vunpack.c.l.b16 %v405
        %v566 = vunpack.c.h.b16 %v405
        %v567 = vunpack.c.l.b16 %v406
        %v568 = vunpack.c.l.b16 %v407
        %v569 = vunpack.c.h.b16 %v407
        %v570 = vunpack.c.l.b16 %v408
        %v571 = vunpack.c.l.b16 %v409
        %v572 = vunpack.c.h.b16 %v409
        %v573 = vunpack.c.l.b16 %v410
        %v574 = vunpack.c.l.b16 %v411
        %v575 = vunpack.c.h.b16 %v411
        %v576 = vunpack.c.l.b16 %v412
        %v577 = vunpack.c.l.b16 %v413
        %v578 = vunpack.c.h.b16 %v413
        %v579 = vunpack.c.l.b16 %v414
        %v580 = vunpack.c.l.b16 %v415
        %v581 = vunpack.c.h.b16 %v415
        %v582 = vunpack.c.l.b16 %v416
        %v583 = vunpack.c.l.b16 %v417
        %v584 = vunpack.c.h.b16 %v417
        %v585 = vunpack.c.l.b16 %v418
        %v586 = vunpack.c.l.b16 %v419
        %v587 = vunpack.c.h.b16 %v419
        %v588 = vunpack.c.l.b16 %v420
        %v589 = vunpack.c.l.b16 %v421
        %v590 = vunpack.c.h.b16 %v421
        %v591 = vunpack.c.l.b16 %v422
        %v592 = vunpack.c.l.b16 %v423
        %v593 = vunpack.c.h.b16 %v423
        %v594 = vunpack.c.l.b16 %v424
        %v595 = vunpack.c.l.b16 %v425
        %v596 = vunpack.c.h.b16 %v425
        %v597 = vunpack.c.l.b16 %v426
        %v598 = vunpack.c.l.b16 %v427
        %v599 = vunpack.c.h.b16 %v427
        %v600 = vunpack.c.l.b16 %v428
        %v601 = vunpack.c.l.b16 %v429
        %v602 = vunpack.c.h.b16 %v429
        %v603 = vunpack.c.l.b16 %v430
        %v604 = vunpack.c.l.b16 %v431
        %v605 = vunpack.c.h.b16 %v431
        %v606 = vunpack.c.l.b16 %v432
        %v607 = vunpack.c.l.b16 %v433
        %v608 = vunpack.c.h.b16 %v433
        %v609 = vunpack.c.l.b16 %v434
        %v610 = vunpack.c.l.b16 %v435
        %v611 = vunpack.c.h.b16 %v435
        %v612 = vunpack.c.l.b16 %v436
        %v613 = vunpack.c.l.b16 %v437
        %v614 = vunpack.c.h.b16 %v437
        %v615 = vunpack.c.l.b16 %v438
        %v616 = vpack.c.b16 %v523, %v520
        %v617 = vpack.c.b16 %v524, %v521
        %v618 = vpack.c.b16 %v525, %v522
        %v619 = vpack.c.b16 %v529, %v526
        %v620 = vpack.c.b16 %v530, %v527
        %v621 = vpack.c.b16 %v531, %v528
        %v622 = vpack.c.b16 %v535, %v532
        %v623 = vpack.c.b16 %v536, %v533
        %v624 = vpack.c.b16 %v537, %v534
        %v625 = vpack.c.b16 %v541, %v538
        %v626 = vpack.c.b16 %v542, %v539
        %v627 = vpack.c.b16 %v543, %v540
        %v628 = vpack.c.b16 %v547, %v544
        %v629 = vpack.c.b16 %v548, %v545
        %v630 = vpack.c.b16 %v549, %v546
        %v631 = vpack.c.b16 %v553, %v550
        %v632 = vpack.c.b16 %v554, %v551
        %v633 = vpack.c.b16 %v555, %v552
        %v634 = vpack.c.b16 %v559, %v556
        %v635 = vpack.c.b16 %v560, %v557
        %v636 = vpack.c.b16 %v561, %v558
        %v637 = vpack.c.b16 %v565, %v562
        %v638 = vpack.c.b16 %v566, %v563
        %v639 = vpack.c.b16 %v567, %v564
        %v640 = vpack.c.b16 %v571, %v568
        %v641 = vpack.c.b16 %v572, %v569
        %v642 = vpack.c.b16 %v573, %v570
        %v643 = vpack.c.b16 %v577, %v574
        %v644 = vpack.c.b16 %v578, %v575
        %v645 = vpack.c.b16 %v579, %v576
        %v646 = vpack.c.b16 %v583, %v580
        %v647 = vpack.c.b16 %v584, %v581
        %v648 = vpack.c.b16 %v585, %v582
        %v649 = vpack.c.b16 %v589, %v586
        %v650 = vpack.c.b16 %v590, %v587
        %v651 = vpack.c.b16 %v591, %v588
        %v652 = vpack.c.b16 %v595, %v592
        %v653 = vpack.c.b16 %v596, %v593
        %v654 = vpack.c.b16 %v597, %v594
        %v655 = vpack.c.b16 %v601, %v598
        %v656 = vpack.c.b16 %v602, %v599
        %v657 = vpack.c.b16 %v603, %v600
        %v658 = vpack.c.b16 %v607, %v604
        %v659 = vpack.c.b16 %v608, %v605
        %v660 = vpack.c.b16 %v609, %v606
        %v661 = vpack.c.b16 %v613, %v610
        %v662 = vpack.c.b16 %v614, %v611
        %v663 = vpack.c.b16 %v615, %v612
        %712 = vmatprep.subr.bf16.mxu0 %v617
        %713 = vmatpush1.bf16.msra.mxu0 %v616
        %714 = vmatprep.subr.bf16.mxu0 %v620
        %715 = vmatpush1.bf16.msra.mxu0 %v619
        %716 = vmatprep.subr.bf16.mxu0 %v623
        %717 = vmatpush1.bf16.msra.mxu0 %v622
        %718 = vmatprep.subr.bf16.mxu0 %v626
        %719 = vmatpush1.bf16.msra.mxu0 %v625
        %720 = vmatprep.subr.bf16.mxu0 %v629
        %721 = vmatpush1.bf16.msra.mxu0 %v628
        %722 = vmatprep.subr.bf16.mxu0 %v632
        %723 = vmatpush1.bf16.msra.mxu0 %v631
        %724 = vmatprep.subr.bf16.mxu0 %v635
        %725 = vmatpush1.bf16.msra.mxu0 %v634
        %726 = vmatprep.subr.bf16.mxu0 %v638
        %727 = vmatpush1.bf16.msra.mxu0 %v637
        %728 = vmatprep.subr.bf16.mxu0 %v641
        %729 = vmatpush1.bf16.msra.mxu0 %v640
        %730 = vmatprep.subr.bf16.mxu0 %v644
        %731 = vmatpush1.bf16.msra.mxu0 %v643
        %732 = vmatprep.subr.bf16.mxu0 %v647
        %733 = vmatpush1.bf16.msra.mxu0 %v646
        %734 = vmatprep.subr.bf16.mxu0 %v650
        %735 = vmatpush1.bf16.msra.mxu0 %v649
        %736 = vmatprep.subr.bf16.mxu0 %v653
        %737 = vmatpush1.bf16.msra.mxu0 %v652
        %738 = vmatprep.subr.bf16.mxu0 %v656
        %739 = vmatpush1.bf16.msra.mxu0 %v655
        %740 = vmatprep.subr.bf16.mxu0 %v659
        %741 = vmatpush1.bf16.msra.mxu0 %v658
        %742 = vmatprep.subr.bf16.mxu0 %v662
        %743 = vmatpush1.bf16.msra.mxu0 %v661
        %744 = vmatprep.mubr.bf16.mxu0 %v374
        %745 = vmatmul.mubr.bf16.gmra.mrb[0].mxu0 %v373
        %v746 = vpop.f32.mrb[0].mxu0
        %v747 = vadd.f32 %v444, %v746
        %v748 = vpop.f32.mrb[0].mxu0
        %v749 = vadd.f32 %v448, %v748
        %v750 = vpop.f32.mrb[0].mxu0
        %v751 = vpop.f32.mrb[0].mxu0
        %752 = vdwg.mxu0
        %753 = vmatprep.subr.bf16.mxu0 0
        %754 = vmatpush1.bf16.msra.mxu0 %v618
        %755 = vmatprep.subr.bf16.mxu0 0
        %756 = vmatpush1.bf16.msra.mxu0 %v621
        %757 = vmatprep.subr.bf16.mxu0 0
        %758 = vmatpush1.bf16.msra.mxu0 %v624
        %759 = vmatprep.subr.bf16.mxu0 0
        %760 = vmatpush1.bf16.msra.mxu0 %v627
        %761 = vmatprep.subr.bf16.mxu0 0
        %762 = vmatpush1.bf16.msra.mxu0 %v630
        %763 = vmatprep.subr.bf16.mxu0 0
        %764 = vmatpush1.bf16.msra.mxu0 %v633
        %765 = vmatprep.subr.bf16.mxu0 0
        %766 = vmatpush1.bf16.msra.mxu0 %v636
        %767 = vmatprep.subr.bf16.mxu0 0
        %768 = vmatpush1.bf16.msra.mxu0 %v639
        %769 = vmatprep.subr.bf16.mxu0 0
        %770 = vmatpush1.bf16.msra.mxu0 %v642
        %771 = vmatprep.subr.bf16.mxu0 0
        %772 = vmatpush1.bf16.msra.mxu0 %v645
        %773 = vmatprep.subr.bf16.mxu0 0
        %774 = vmatpush1.bf16.msra.mxu0 %v648
        %775 = vmatprep.subr.bf16.mxu0 0
        %776 = vmatpush1.bf16.msra.mxu0 %v651
        %777 = vmatprep.subr.bf16.mxu0 0
        %778 = vmatpush1.bf16.msra.mxu0 %v654
        %779 = vmatprep.subr.bf16.mxu0 0
        %780 = vmatpush1.bf16.msra.mxu0 %v657
        %781 = vmatprep.subr.bf16.mxu0 0
        %782 = vmatpush1.bf16.msra.mxu0 %v660
        %783 = vmatprep.subr.bf16.mxu0 0
        %784 = vmatpush1.bf16.msra.mxu0 %v663
        %785 = vmatprep.mubr.bf16.mxu0 %v374
        %786 = vmatmul.mubr.bf16.gmra.mrb[0].mxu0 %v373
        %v787 = vpop.f32.mrb[0].mxu0
        %v788 = vadd.f32 %v452, %v787
        %v789 = vpop.f32.mrb[0].mxu0
        %v790 = vpop.f32.mrb[0].mxu0
        %v791 = vpop.f32.mrb[0].mxu0
        %792 = vdwg.mxu0
        %v793 = vmax.f32 %v747, 0.0
        %v794 = vmax.f32 %v749, 0.0
        %v795 = vmax.f32 %v788, 0.0
        %v796 = vpack.c.bf16 %v793, %v793
        %v797 = vpack.c.bf16 %v794, %v794
        %v798 = vpack.c.bf16 %v795, %v795
        %v799 = vld [vmem:[#allocation7] sm:$0xff]
        %v800 = vld [vmem:[#allocation7 + $0x8] sm:$0xff]
        %v801 = vld [vmem:[#allocation7 + $0x10] sm:$0xff]
        %v802 = vld [vmem:[#allocation7 + $0x18] sm:$0xff]
        %v803 = vld [vmem:[#allocation7 + $0x20] sm:$0xff]
        %v804 = vld [vmem:[#allocation7 + $0x28] sm:$0xff]
        %v805 = vld [vmem:[#allocation7 + $0x30] sm:$0xff]
        %v806 = vld [vmem:[#allocation7 + $0x38] sm:$0xff]
        %v807 = vld [vmem:[#allocation7 + $0x40] sm:$0xff]
        %v808 = vld [vmem:[#allocation7 + $0x48] sm:$0xff]
        %v809 = vld [vmem:[#allocation7 + $0x50] sm:$0xff]
        %v810 = vld [vmem:[#allocation7 + $0x58] sm:$0xff]
        %v811 = vld [vmem:[#allocation7 + $0x60] sm:$0xff]
        %v812 = vld [vmem:[#allocation7 + $0x68] sm:$0xff]
        %v813 = vld [vmem:[#allocation7 + $0x70] sm:$0xff]
        %v814 = vld [vmem:[#allocation7 + $0x78] sm:$0xff]
        %v815 = vld [vmem:[#allocation7 + $0x80] sm:$0xff]
        %v816 = vld [vmem:[#allocation7 + $0x88] sm:$0xff]
        %v817 = vld [vmem:[#allocation7 + $0x90] sm:$0xff]
        %v818 = vld [vmem:[#allocation7 + $0x98] sm:$0xff]
        %v819 = vld [vmem:[#allocation7 + $0xa0] sm:$0xff]
        %v820 = vld [vmem:[#allocation7 + $0xa8] sm:$0xff]
        %v821 = vld [vmem:[#allocation7 + $0xb0] sm:$0xff]
        %v822 = vld [vmem:[#allocation7 + $0xb8] sm:$0xff]
        %v823 = vld [vmem:[#allocation7 + $0xc0] sm:$0xff]
        %v824 = vld [vmem:[#allocation7 + $0xc8] sm:$0xff]
        %v825 = vld [vmem:[#allocation7 + $0xd0] sm:$0xff]
        %v826 = vld [vmem:[#allocation7 + $0xd8] sm:$0xff]
        %v827 = vld [vmem:[#allocation7 + $0xe0] sm:$0xff]
        %v828 = vld [vmem:[#allocation7 + $0xe8] sm:$0xff]
        %v829 = vld [vmem:[#allocation7 + $0xf0] sm:$0xff]
        %v830 = vld [vmem:[#allocation7 + $0xf8] sm:$0xff]
        %v831 = vld [vmem:[#allocation7 + $0x100] sm:$0xff]
        %v832 = vld [vmem:[#allocation7 + $0x108] sm:$0xff]
        %v833 = vld [vmem:[#allocation7 + $0x110] sm:$0xff]
        %v834 = vld [vmem:[#allocation7 + $0x118] sm:$0xff]
        %v835 = vld [vmem:[#allocation7 + $0x120] sm:$0xff]
        %v836 = vld [vmem:[#allocation7 + $0x128] sm:$0xff]
        %v837 = vld [vmem:[#allocation7 + $0x130] sm:$0xff]
        %v838 = vld [vmem:[#allocation7 + $0x138] sm:$0xff]
        %v839 = vld [vmem:[#allocation7 + $0x140] sm:$0xff]
        %v840 = vld [vmem:[#allocation7 + $0x148] sm:$0xff]
        %v841 = vld [vmem:[#allocation7 + $0x150] sm:$0xff]
        %v842 = vld [vmem:[#allocation7 + $0x158] sm:$0xff]
        %v843 = vld [vmem:[#allocation7 + $0x160] sm:$0xff]
        %v844 = vld [vmem:[#allocation7 + $0x168] sm:$0xff]
        %v845 = vld [vmem:[#allocation7 + $0x170] sm:$0xff]
        %v846 = vld [vmem:[#allocation7 + $0x178] sm:$0xff]
        %v847 = vld [vmem:[%s6] sm:$0x3]
        %v849 = vlaneseq
        %v850 = vshrl.u32 %v849, 7
        %v851 = vsub.s32 0, %v850
        %v852 = vrot.slane %v847, %v851
        %v853 = vlaneseq
        %v854 = vshrl.u32 %v853, 7
        %v855 = vsub.s32 1, %v854
        %v856 = vrot.slane %v847, %v855
        %v907 = vunpack.c.l.b16 %v799
        %v908 = vunpack.c.h.b16 %v799
        %v909 = vunpack.c.l.b16 %v800
        %v910 = vunpack.c.h.b16 %v800
        %v911 = vunpack.c.l.b16 %v801
        %v912 = vunpack.c.h.b16 %v801
        %v913 = vunpack.c.l.b16 %v802
        %v914 = vunpack.c.h.b16 %v802
        %v915 = vunpack.c.l.b16 %v803
        %v916 = vunpack.c.h.b16 %v803
        %v917 = vunpack.c.l.b16 %v804
        %v918 = vunpack.c.h.b16 %v804
        %v919 = vunpack.c.l.b16 %v805
        %v920 = vunpack.c.h.b16 %v805
        %v921 = vunpack.c.l.b16 %v806
        %v922 = vunpack.c.h.b16 %v806
        %v923 = vunpack.c.l.b16 %v807
        %v924 = vunpack.c.h.b16 %v807
        %v925 = vunpack.c.l.b16 %v808
        %v926 = vunpack.c.h.b16 %v808
        %v927 = vunpack.c.l.b16 %v809
        %v928 = vunpack.c.h.b16 %v809
        %v929 = vunpack.c.l.b16 %v810
        %v930 = vunpack.c.h.b16 %v810
        %v931 = vunpack.c.l.b16 %v811
        %v932 = vunpack.c.h.b16 %v811
        %v933 = vunpack.c.l.b16 %v812
        %v934 = vunpack.c.h.b16 %v812
        %v935 = vunpack.c.l.b16 %v813
        %v936 = vunpack.c.h.b16 %v813
        %v937 = vunpack.c.l.b16 %v814
        %v938 = vunpack.c.h.b16 %v814
        %v939 = vunpack.c.l.b16 %v815
        %v940 = vunpack.c.h.b16 %v815
        %v941 = vunpack.c.l.b16 %v816
        %v942 = vunpack.c.h.b16 %v816
        %v943 = vunpack.c.l.b16 %v817
        %v944 = vunpack.c.h.b16 %v817
        %v945 = vunpack.c.l.b16 %v818
        %v946 = vunpack.c.h.b16 %v818
        %v947 = vunpack.c.l.b16 %v819
        %v948 = vunpack.c.h.b16 %v819
        %v949 = vunpack.c.l.b16 %v820
        %v950 = vunpack.c.h.b16 %v820
        %v951 = vunpack.c.l.b16 %v821
        %v952 = vunpack.c.h.b16 %v821
        %v953 = vunpack.c.l.b16 %v822
        %v954 = vunpack.c.h.b16 %v822
        %v955 = vunpack.c.l.b16 %v823
        %v956 = vunpack.c.h.b16 %v823
        %v957 = vunpack.c.l.b16 %v824
        %v958 = vunpack.c.h.b16 %v824
        %v959 = vunpack.c.l.b16 %v825
        %v960 = vunpack.c.h.b16 %v825
        %v961 = vunpack.c.l.b16 %v826
        %v962 = vunpack.c.h.b16 %v826
        %v963 = vunpack.c.l.b16 %v827
        %v964 = vunpack.c.h.b16 %v827
        %v965 = vunpack.c.l.b16 %v828
        %v966 = vunpack.c.h.b16 %v828
        %v967 = vunpack.c.l.b16 %v829
        %v968 = vunpack.c.h.b16 %v829
        %v969 = vunpack.c.l.b16 %v830
        %v970 = vunpack.c.h.b16 %v830
        %v971 = vunpack.c.l.b16 %v831
        %v972 = vunpack.c.h.b16 %v831
        %v973 = vunpack.c.l.b16 %v832
        %v974 = vunpack.c.h.b16 %v832
        %v975 = vunpack.c.l.b16 %v833
        %v976 = vunpack.c.h.b16 %v833
        %v977 = vunpack.c.l.b16 %v834
        %v978 = vunpack.c.h.b16 %v834
        %v979 = vunpack.c.l.b16 %v835
        %v980 = vunpack.c.h.b16 %v835
        %v981 = vunpack.c.l.b16 %v836
        %v982 = vunpack.c.h.b16 %v836
        %v983 = vunpack.c.l.b16 %v837
        %v984 = vunpack.c.h.b16 %v837
        %v985 = vunpack.c.l.b16 %v838
        %v986 = vunpack.c.h.b16 %v838
        %v987 = vunpack.c.l.b16 %v839
        %v988 = vunpack.c.h.b16 %v839
        %v989 = vunpack.c.l.b16 %v840
        %v990 = vunpack.c.h.b16 %v840
        %v991 = vunpack.c.l.b16 %v841
        %v992 = vunpack.c.h.b16 %v841
        %v993 = vunpack.c.l.b16 %v842
        %v994 = vunpack.c.h.b16 %v842
        %v995 = vunpack.c.l.b16 %v843
        %v996 = vunpack.c.h.b16 %v843
        %v997 = vunpack.c.l.b16 %v844
        %v998 = vunpack.c.h.b16 %v844
        %v999 = vunpack.c.l.b16 %v845
        %v1000 = vunpack.c.h.b16 %v845
        %v1001 = vunpack.c.l.b16 %v846
        %v1002 = vunpack.c.h.b16 %v846
        %v1003 = vpack.c.b16 %v909, %v907
        %v1004 = vpack.c.b16 %v910, %v908
        %v1005 = vpack.c.b16 %v913, %v911
        %v1006 = vpack.c.b16 %v914, %v912
        %v1007 = vpack.c.b16 %v917, %v915
        %v1008 = vpack.c.b16 %v918, %v916
        %v1009 = vpack.c.b16 %v921, %v919
        %v1010 = vpack.c.b16 %v922, %v920
        %v1011 = vpack.c.b16 %v925, %v923
        %v1012 = vpack.c.b16 %v926, %v924
        %v1013 = vpack.c.b16 %v929, %v927
        %v1014 = vpack.c.b16 %v930, %v928
        %v1015 = vpack.c.b16 %v933, %v931
        %v1016 = vpack.c.b16 %v934, %v932
        %v1017 = vpack.c.b16 %v937, %v935
        %v1018 = vpack.c.b16 %v938, %v936
        %v1019 = vpack.c.b16 %v941, %v939
        %v1020 = vpack.c.b16 %v942, %v940
        %v1021 = vpack.c.b16 %v945, %v943
        %v1022 = vpack.c.b16 %v946, %v944
        %v1023 = vpack.c.b16 %v949, %v947
        %v1024 = vpack.c.b16 %v950, %v948
        %v1025 = vpack.c.b16 %v953, %v951
        %v1026 = vpack.c.b16 %v954, %v952
        %v1027 = vpack.c.b16 %v957, %v955
        %v1028 = vpack.c.b16 %v958, %v956
        %v1029 = vpack.c.b16 %v961, %v959
        %v1030 = vpack.c.b16 %v962, %v960
        %v1031 = vpack.c.b16 %v965, %v963
        %v1032 = vpack.c.b16 %v966, %v964
        %v1033 = vpack.c.b16 %v969, %v967
        %v1034 = vpack.c.b16 %v970, %v968
        %v1035 = vpack.c.b16 %v973, %v971
        %v1036 = vpack.c.b16 %v974, %v972
        %v1037 = vpack.c.b16 %v977, %v975
        %v1038 = vpack.c.b16 %v978, %v976
        %v1039 = vpack.c.b16 %v981, %v979
        %v1040 = vpack.c.b16 %v982, %v980
        %v1041 = vpack.c.b16 %v985, %v983
        %v1042 = vpack.c.b16 %v986, %v984
        %v1043 = vpack.c.b16 %v989, %v987
        %v1044 = vpack.c.b16 %v990, %v988
        %v1045 = vpack.c.b16 %v993, %v991
        %v1046 = vpack.c.b16 %v994, %v992
        %v1047 = vpack.c.b16 %v997, %v995
        %v1048 = vpack.c.b16 %v998, %v996
        %v1049 = vpack.c.b16 %v1001, %v999
        %v1050 = vpack.c.b16 %v1002, %v1000
        %1099 = vmatprep.subr.bf16.mxu0 %v1004
        %1100 = vmatpush1.bf16.msra.mxu0 %v1003
        %1101 = vmatprep.subr.bf16.mxu0 %v1006
        %1102 = vmatpush1.bf16.msra.mxu0 %v1005
        %1103 = vmatprep.subr.bf16.mxu0 %v1008
        %1104 = vmatpush1.bf16.msra.mxu0 %v1007
        %1105 = vmatprep.subr.bf16.mxu0 %v1010
        %1106 = vmatpush1.bf16.msra.mxu0 %v1009
        %1107 = vmatprep.subr.bf16.mxu0 %v1012
        %1108 = vmatpush1.bf16.msra.mxu0 %v1011
        %1109 = vmatprep.subr.bf16.mxu0 %v1014
        %1110 = vmatpush1.bf16.msra.mxu0 %v1013
        %1111 = vmatprep.subr.bf16.mxu0 %v1016
        %1112 = vmatpush1.bf16.msra.mxu0 %v1015
        %1113 = vmatprep.subr.bf16.mxu0 %v1018
        %1114 = vmatpush1.bf16.msra.mxu0 %v1017
        %1115 = vmatprep.subr.bf16.mxu0 %v1020
        %1116 = vmatpush1.bf16.msra.mxu0 %v1019
        %1117 = vmatprep.subr.bf16.mxu0 %v1022
        %1118 = vmatpush1.bf16.msra.mxu0 %v1021
        %1119 = vmatprep.subr.bf16.mxu0 %v1024
        %1120 = vmatpush1.bf16.msra.mxu0 %v1023
        %1121 = vmatprep.subr.bf16.mxu0 %v1026
        %1122 = vmatpush1.bf16.msra.mxu0 %v1025
        %1123 = vmatprep.subr.bf16.mxu0 %v1028
        %1124 = vmatpush1.bf16.msra.mxu0 %v1027
        %1125 = vmatprep.subr.bf16.mxu0 %v1030
        %1126 = vmatpush1.bf16.msra.mxu0 %v1029
        %1127 = vmatprep.subr.bf16.mxu0 %v1032
        %1128 = vmatpush1.bf16.msra.mxu0 %v1031
        %1129 = vmatprep.subr.bf16.mxu0 %v1034
        %1130 = vmatpush1.bf16.msra.mxu0 %v1033
        %1131 = vmatprep.mubr.bf16.mxu0 %v797
        %1132 = vmatmul.mubr.bf16.gmra.mrb[0].mxu0 %v796
        %v1133 = vpop.f32.mrb[0].mxu0
        %v1134 = vadd.f32 %v852, %v1133
        %v1135 = vpop.f32.mrb[0].mxu0
        %v1136 = vadd.f32 %v856, %v1135
        %v1137 = vpop.f32.mrb[0].mxu0
        %v1138 = vpop.f32.mrb[0].mxu0
        %1139 = vdwg.mxu0
        %1140 = vmatprep.subr.bf16.mxu0 %v1036
        %1141 = vmatpush1.bf16.msra.mxu0 %v1035
        %1142 = vmatprep.subr.bf16.mxu0 %v1038
        %1143 = vmatpush1.bf16.msra.mxu0 %v1037
        %1144 = vmatprep.subr.bf16.mxu0 %v1040
        %1145 = vmatpush1.bf16.msra.mxu0 %v1039
        %1146 = vmatprep.subr.bf16.mxu0 %v1042
        %1147 = vmatpush1.bf16.msra.mxu0 %v1041
        %1148 = vmatprep.subr.bf16.mxu0 %v1044
        %1149 = vmatpush1.bf16.msra.mxu0 %v1043
        %1150 = vmatprep.subr.bf16.mxu0 %v1046
        %1151 = vmatpush1.bf16.msra.mxu0 %v1045
        %1152 = vmatprep.subr.bf16.mxu0 %v1048
        %1153 = vmatpush1.bf16.msra.mxu0 %v1047
        %1154 = vmatprep.subr.bf16.mxu0 %v1050
        %1155 = vmatpush1.bf16.msra.mxu0 %v1049
        %1156 = vmatprep.subr.bf16.mxu0 0
        %1157 = vmatpush1.bf16.msra.mxu0 0
        %1158 = vmatprep.subr.bf16.mxu0 0
        %1159 = vmatpush1.bf16.msra.mxu0 0
        %1160 = vmatprep.subr.bf16.mxu0 0
        %1161 = vmatpush1.bf16.msra.mxu0 0
        %1162 = vmatprep.subr.bf16.mxu0 0
        %1163 = vmatpush1.bf16.msra.mxu0 0
        %1164 = vmatprep.subr.bf16.mxu0 0
        %1165 = vmatpush1.bf16.msra.mxu0 0
        %1166 = vmatprep.subr.bf16.mxu0 0
        %1167 = vmatpush1.bf16.msra.mxu0 0
        %1168 = vmatprep.subr.bf16.mxu0 0
        %1169 = vmatpush1.bf16.msra.mxu0 0
        %1170 = vmatprep.subr.bf16.mxu0 0
        %1171 = vmatpush1.bf16.msra.mxu0 0
        %1172 = vmatprep.mubr.bf16.mxu0 0
        %1173 = vmatmul.mubr.bf16.gmra.mrb[0].mxu0 %v798
        %v1174 = vpop.f32.mrb[0].mxu0
        %v1175 = vadd.f32 %v1134, %v1174
        %v1176 = vpop.f32.mrb[0].mxu0
        %v1177 = vadd.f32 %v1136, %v1176
        %v1178 = vpop.f32.mrb[0].mxu0
        %v1179 = vpop.f32.mrb[0].mxu0
        %1180 = vdwg.mxu0
        %v1181 = vadd.f32 %v1175, %v325
        %v1182 = vadd.f32 %v1177, %v326
        %1183 = vst [vmem:[%s323] sm:$0xff] %v1181
        %1184 = vst [vmem:[%s323 + $0x8] sm:$0xff] %v1182
        %s1185 = sand.u32 %s185, 1
        %s1186 = scalar_lea.sflag [#allocation4], %s1185
        %s1187 = sand.u32 %s185, 1
        %s1188 = smul.addr %s1187, 16
        %s1189 = scalar_lea.vmem [#allocation8], %s1188
        // Predicated region
        $region61: #{tpu_custom_call.1} parent=47 // pred_check
          %p1190 = pneg %p195
        $region62: #{tpu_custom_call.1} parent=47 // pred_check_branch
          %1192 = sbr.rel (%p1190) target = $region64
        $region63: #{tpu_custom_call.1} parent=47 // pred_region
          %s1194 = ssub.s32 256, 256
          %1195 = vsyncadd %s1186, %s1194
          %s1196 = smul.addr %s25, 2
          %s1197 = smul.addr %s1196, 128
          %s1198 = scalar_lea.hbm %s7, %s1197
          %s1200 = sshll.u32 %s1189, 4
          %s1201 = int_to_ptr.vmem [resolvable:$true] %s1200
          %1203 = dma.vmem_to_hbm [thread:$0]  %s1201, 256, %s1198, %s1186
        $region64: #{tpu_custom_call.1} parent=47 // pred_fallthru
          _
      $region48: #{tpu_custom_call.1} parent=5 // pred_fallthru
        _
      %p1204 = scmp.le.s32.totalorder 2, %s20
      // Predicated region
      $region65: #{tpu_custom_call.1} parent=5 // pred_check
        %p1205 = pneg %p1204
      $region66: #{tpu_custom_call.1} parent=5 // pred_check_branch
        %1207 = sbr.rel (%p1205) target = $region68
      $region67: #{tpu_custom_call.1} parent=5 // pred_region
        %s1208 = ssub.s32 %s20, 2
        // Predicated region
        $region69: #{tpu_custom_call.1} parent=67 // pred_check
          %p1209 = pneg %p201
        $region70: #{tpu_custom_call.1} parent=67 // pred_check_branch
          %1211 = sbr.rel (%p1209) target = $region72
        $region71: #{tpu_custom_call.1} parent=67 // pred_region
          %s1212 = sand.u32 %s186, 1
          %s1213 = scalar_lea.sflag [#allocation4], %s1212
          %s1214 = sand.u32 %s186, 1
          %s1215 = smul.addr %s1214, 16
          %s1216 = scalar_lea.vmem [#allocation8], %s1215
          %1217 = dma.done %s1213, 256
        $region72: #{tpu_custom_call.1} parent=67 // pred_fallthru
          _
      $region68: #{tpu_custom_call.1} parent=5 // pred_fallthru
        _
    $region6: #{tpu_custom_call.1} parent=1 // loop_footer
      %s24 = sadd.s32 1, %s20
    $region7: #{tpu_custom_call.1} parent=1 // loop_footer_branch
      %19 = sbr.rel target = $region3
    $region8: #{tpu_custom_call.1} parent=1 // loop_exit
      _
    %1218 = vsyncpa [#allocation3], 1
    %s1219 = scalar_lea.sflag [#allocation3], 1
    %1220 = vsyncpa %s1219, 1
    %1221 = vsyncpa [#allocation6], 1
    %1222 = vsyncpa [#allocation4], 1
    %s1223 = scalar_lea.sflag [#allocation4], 1
    %1224 = vsyncpa %s1223, 1

// kernel: tpu_custom_call.1
$region0: #{tpu_custom_call.1}
  #allocation0 [shape = 'u32[]', space=smem, size = 0x4, offset = 0x4, fixed_abs, tag = 'smem constant byte address 0x4 - core index']
  #allocation1 [shape = 'u32[144,128]{1,0:T(1,128)}', space=vmem, size = 0x12000, scoped, tag = 'internal scratch']
  %s0 = inlined_call_operand.hbm [shape: f32[16,256], index: 0, kind: input, shape index: {}]
  %s1 = inlined_call_operand.vmem [shape: f32[1,256], index: 1, kind: input, shape index: {}]
  %s2 = inlined_call_operand.vmem [shape: f32[1,256], index: 2, kind: input, shape index: {}]
  %s3 = inlined_call_operand.hbm [shape: bf16[256,384], index: 3, kind: input, shape index: {}]
  %s4 = inlined_call_operand.vmem [shape: f32[1,384], index: 4, kind: input, shape index: {}]
  %s5 = inlined_call_operand.hbm [shape: bf16[384,256], index: 5, kind: input, shape index: {}]
  %s6 = inlined_call_operand.vmem [shape: f32[1,256], index: 6, kind: input, shape index: {}]
  %s7 = inlined_call_operand.hbm [shape: f32[16,256], index: 7, kind: output, shape index: {}]
  %s8 = sld [smem:[#allocation0]]
  $region73: #{tpu_custom_call.1} parent=0
    _
  %s10 = ssub.s32 1, %s8
  %s11 = scalar_select 0, %s10, %s8
  $region1: #{tpu_custom_call.1} parent=0
    #allocation2 [shape = 'u8[16384]{0}', space=vmem, size = 0x4000, scoped, tag = 'input window, operand 0']
    #allocation3 [shape = 's32[2]{0}', space=sflag, size = 0x8, scoped, tag = 'scoped memory for tpu_custom_call.1']
    #allocation4 [shape = 's32[2]{0}', space=sflag, size = 0x8, scoped, tag = 'scoped memory for tpu_custom_call.1']
    #allocation5 [shape = 'u8[196608]{0}', space=vmem, size = 0x30000, scoped, tag = 'input window, operand 3, single buffered']
    #allocation6 [shape = 's32[1]{0}', space=sflag, size = 0x4, scoped, tag = 'scoped memory for tpu_custom_call.1']
    #allocation7 [shape = 'u8[196608]{0}', space=vmem, size = 0x30000, scoped, tag = 'input window, operand 5, single buffered']
    #allocation8 [shape = 'u8[16384]{0}', space=vmem, size = 0x4000, scoped, tag = 'output window, operand 0']
    %12 = vsyncpa [#allocation3], 0
    %s13 = scalar_lea.sflag [#allocation3], 1
    %14 = vsyncpa %s13, 0
    %15 = vsyncpa [#allocation6], 0
    %16 = vsyncpa [#allocation4], 0
    %s17 = scalar_lea.sflag [#allocation4], 1
    %18 = vsyncpa %s17, 0
    loop: start=0, step=1, limit=4
    $region2: #{tpu_custom_call.1} parent=1 // loop_pre_header
      _
    $region3: #{tpu_custom_call.1} parent=1 // loop_header
      %s20 = sphi 0, %s24
      %p21 = scmp.ge.s32.totalorder %s20, 4
      %s30 = sphi 0, %s32
      %s33 = sphi 0, %s30
      %s34 = sphi 0, %s33
      %s50 = sphi 0, %s34
      %s54 = sphi 0, %s54
      %s56 = sphi 0, %s54
      %s57 = sphi 0, %s56
      %s71 = sphi 0, %s57
      %s75 = sphi 0, %s75
      %s77 = sphi 0, %s75
      %s78 = sphi 0, %s77
      %s92 = sphi 0, %s78
      %s96 = sphi 0, %s96
      %s98 = sphi 0, %s96
      %s99 = sphi 0, %s98
      %s113 = sphi 0, %s99
      %s117 = sphi 0, %s117
      %s119 = sphi 0, %s117
      %s120 = sphi 0, %s119
      %s134 = sphi 0, %s120
      %s138 = sphi 0, %s138
      %s140 = sphi 0, %s138
      %s141 = sphi 0, %s140
      %s155 = sphi 0, %s141
      %s159 = sphi 0, %s159
      %s161 = sphi 0, %s159
      %s162 = sphi 0, %s161
      %s176 = sphi 0, %s162
      %s182 = sphi 0, %s184
      %s185 = sphi 0, %s182
      %s186 = sphi 0, %s185
      %s202 = sphi 0, %s186
    $region4: #{tpu_custom_call.1} parent=1 // loop_header_branch
      %23 = sbr.rel (%p21) target = $region8
    $region5: #{tpu_custom_call.1} parent=1 // loop_body
      %s25 = ssub.s32 %s20, 1
      %s26 = ssub.s32 %s20, 2
      %s27 = sadd.s32 %s20, 1
      %s28 = ssub.s32 %s20, %s27
      %p29 = scmp.eq.s32.totalorder %s28, 0
      %s31 = sadd.s32 %s30, 1
      %s32 = scalar_select %p29, %s30, %s31
      %p35 = pneg %p29
      %p36 = scmp.eq.s32.totalorder %s20, 1
      %p37 = por %p35, %p36
      %p38 = scmp.ne.s32.totalorder %s30, %s33
      %p39 = scmp.eq.s32.totalorder %s20, 0
      %p40 = por %p38, %p39
      %p41 = scmp.ne.s32.totalorder %s30, %s33
      %p42 = scmp.eq.s32.totalorder %s25, 1
      %p43 = por %p41, %p42
      %p44 = scmp.ne.s32.totalorder %s33, %s34
      %p45 = scmp.eq.s32.totalorder %s25, 0
      %p46 = por %p44, %p45
      %p47 = scmp.ne.s32.totalorder %s33, %s34
      %p48 = scmp.eq.s32.totalorder %s26, 1
      %p49 = por %p47, %p48
      %p51 = scmp.ne.s32.totalorder %s34, %s50
      %p52 = scmp.eq.s32.totalorder %s26, 0
      %p53 = por %p51, %p52
      %s55 = sadd.s32 %s54, 1
      %p58 = scmp.eq.s32.totalorder %s20, 1
      %p59 = scmp.ne.s32.totalorder %s54, %s56
      %p60 = scmp.eq.s32.totalorder %s20, 0
      %p61 = por %p59, %p60
      %p62 = scmp.ne.s32.totalorder %s54, %s56
      %p63 = scmp.eq.s32.totalorder %s25, 1
      %p64 = por %p62, %p63
      %p65 = scmp.ne.s32.totalorder %s56, %s57
      %p66 = scmp.eq.s32.totalorder %s25, 0
      %p67 = por %p65, %p66
      %p68 = scmp.ne.s32.totalorder %s56, %s57
      %p69 = scmp.eq.s32.totalorder %s26, 1
      %p70 = por %p68, %p69
      %p72 = scmp.ne.s32.totalorder %s57, %s71
      %p73 = scmp.eq.s32.totalorder %s26, 0
      %p74 = por %p72, %p73
      %s76 = sadd.s32 %s75, 1
      %p79 = scmp.eq.s32.totalorder %s20, 1
      %p80 = scmp.ne.s32.totalorder %s75, %s77
      %p81 = scmp.eq.s32.totalorder %s20, 0
      %p82 = por %p80, %p81
      %p83 = scmp.ne.s32.totalorder %s75, %s77
      %p84 = scmp.eq.s32.totalorder %s25, 1
      %p85 = por %p83, %p84
      %p86 = scmp.ne.s32.totalorder %s77, %s78
      %p87 = scmp.eq.s32.totalorder %s25, 0
      %p88 = por %p86, %p87
      %p89 = scmp.ne.s32.totalorder %s77, %s78
      %p90 = scmp.eq.s32.totalorder %s26, 1
      %p91 = por %p89, %p90
      %p93 = scmp.ne.s32.totalorder %s78, %s92
      %p94 = scmp.eq.s32.totalorder %s26, 0
      %p95 = por %p93, %p94
      %s97 = sadd.s32 %s96, 1
      %p100 = scmp.eq.s32.totalorder %s20, 1
      %p101 = scmp.ne.s32.totalorder %s96, %s98
      %p102 = scmp.eq.s32.totalorder %s20, 0
      %p103 = por %p101, %p102
      %p104 = scmp.ne.s32.totalorder %s96, %s98
      %p105 = scmp.eq.s32.totalorder %s25, 1
      %p106 = por %p104, %p105
      %p107 = scmp.ne.s32.totalorder %s98, %s99
      %p108 = scmp.eq.s32.totalorder %s25, 0
      %p109 = por %p107, %p108
      %p110 = scmp.ne.s32.totalorder %s98, %s99
      %p111 = scmp.eq.s32.totalorder %s26, 1
      %p112 = por %p110, %p111
      %p114 = scmp.ne.s32.totalorder %s99, %s113
      %p115 = scmp.eq.s32.totalorder %s26, 0
      %p116 = por %p114, %p115
      %s118 = sadd.s32 %s117, 1
      %p121 = scmp.eq.s32.totalorder %s20, 1
      %p122 = scmp.ne.s32.totalorder %s117, %s119
      %p123 = scmp.eq.s32.totalorder %s20, 0
      %p124 = por %p122, %p123
      %p125 = scmp.ne.s32.totalorder %s117, %s119
      %p126 = scmp.eq.s32.totalorder %s25, 1
      %p127 = por %p125, %p126
      %p128 = scmp.ne.s32.totalorder %s119, %s120
      %p129 = scmp.eq.s32.totalorder %s25, 0
      %p130 = por %p128, %p129
      %p131 = scmp.ne.s32.totalorder %s119, %s120
      %p132 = scmp.eq.s32.totalorder %s26, 1
      %p133 = por %p131, %p132
      %p135 = scmp.ne.s32.totalorder %s120, %s134
      %p136 = scmp.eq.s32.totalorder %s26, 0
      %p137 = por %p135, %p136
      %s139 = sadd.s32 %s138, 1
      %p142 = scmp.eq.s32.totalorder %s20, 1
      %p143 = scmp.ne.s32.totalorder %s138, %s140
      %p144 = scmp.eq.s32.totalorder %s20, 0
      %p145 = por %p143, %p144
      %p146 = scmp.ne.s32.totalorder %s138, %s140
      %p147 = scmp.eq.s32.totalorder %s25, 1
      %p148 = por %p146, %p147
      %p149 = scmp.ne.s32.totalorder %s140, %s141
      %p150 = scmp.eq.s32.totalorder %s25, 0
      %p151 = por %p149, %p150
      %p152 = scmp.ne.s32.totalorder %s140, %s141
      %p153 = scmp.eq.s32.totalorder %s26, 1
      %p154 = por %p152, %p153
      %p156 = scmp.ne.s32.totalorder %s141, %s155
      %p157 = scmp.eq.s32.totalorder %s26, 0
      %p158 = por %p156, %p157
      %s160 = sadd.s32 %s159, 1
      %p163 = scmp.eq.s32.totalorder %s20, 1
      %p164 = scmp.ne.s32.totalorder %s159, %s161
      %p165 = scmp.eq.s32.totalorder %s20, 0
      %p166 = por %p164, %p165
      %p167 = scmp.ne.s32.totalorder %s159, %s161
      %p168 = scmp.eq.s32.totalorder %s25, 1
      %p169 = por %p167, %p168
      %p170 = scmp.ne.s32.totalorder %s161, %s162
      %p171 = scmp.eq.s32.totalorder %s25, 0
      %p172 = por %p170, %p171
      %p173 = scmp.ne.s32.totalorder %s161, %s162
      %p174 = scmp.eq.s32.totalorder %s26, 1
      %p175 = por %p173, %p174
      %p177 = scmp.ne.s32.totalorder %s162, %s176
      %p178 = scmp.eq.s32.totalorder %s26, 0
      %p179 = por %p177, %p178
      %s180 = ssub.s32 %s20, %s27
      %p181 = scmp.eq.s32.totalorder %s180, 0
      %s183 = sadd.s32 %s182, 1
      %s184 = scalar_select %p181, %s182, %s183
      %p187 = pneg %p181
      %p188 = scmp.eq.s32.totalorder %s20, 1
      %p189 = por %p187, %p188
      %p190 = scmp.ne.s32.totalorder %s182, %s185
      %p191 = scmp.eq.s32.totalorder %s20, 0
      %p192 = por %p190, %p191
      %p193 = scmp.ne.s32.totalorder %s182, %s185
      %p194 = scmp.eq.s32.totalorder %s25, 1
      %p195 = por %p193, %p194
      %p196 = scmp.ne.s32.totalorder %s185, %s186
      %p197 = scmp.eq.s32.totalorder %s25, 0
      %p198 = por %p196, %p197
      %p199 = scmp.ne.s32.totalorder %s185, %s186
      %p200 = scmp.eq.s32.totalorder %s26, 1
      %p201 = por %p199, %p200
      %p203 = scmp.ne.s32.totalorder %s186, %s202
      %p204 = scmp.eq.s32.totalorder %s26, 0
      %p205 = por %p203, %p204
      %p206 = scmp.le.s32.totalorder 1, %s20
      %p207 = scmp.lt.s32.totalorder %s20, 3
      %p208 = pnand %p206, %p207
      %p209 = pneg %p208
      // Predicated region
      $region9: #{tpu_custom_call.1} parent=5 // pred_check
        _
      $region10: #{tpu_custom_call.1} parent=5 // pred_check_branch
        %211 = sbr.rel (%p208) target = $region12
      $region11: #{tpu_custom_call.1} parent=5 // pred_region
        %s212 = ssub.s32 %s20, 1
        // Predicated region
        $region13: #{tpu_custom_call.1} parent=11 // pred_check
          %p213 = pneg %p67
        $region14: #{tpu_custom_call.1} parent=11 // pred_check_branch
          %215 = sbr.rel (%p213) target = $region16
        $region15: #{tpu_custom_call.1} parent=11 // pred_region
          _
        $region16: #{tpu_custom_call.1} parent=11 // pred_fallthru
          _
        // Predicated region
        $region17: #{tpu_custom_call.1} parent=11 // pred_check
          %p216 = pneg %p88
        $region18: #{tpu_custom_call.1} parent=11 // pred_check_branch
          %218 = sbr.rel (%p216) target = $region20
        $region19: #{tpu_custom_call.1} parent=11 // pred_region
          _
        $region20: #{tpu_custom_call.1} parent=11 // pred_fallthru
          _
        // Predicated region
        $region21: #{tpu_custom_call.1} parent=11 // pred_check
          %p219 = pneg %p109
        $region22: #{tpu_custom_call.1} parent=11 // pred_check_branch
          %221 = sbr.rel (%p219) target = $region24
        $region23: #{tpu_custom_call.1} parent=11 // pred_region
          %s223 = ssub.s32 6144, 6144
          %224 = vsyncadd [#allocation6], %s223
          %s225 = sshll.u32 [#allocation5], 4
          %s226 = int_to_ptr.vmem [resolvable:$true] %s225
          %231 = dma.hbm_to_vmem [thread:$0]  %s3, 6144, %s226, [#allocation6], 192, 192, 12
        $region24: #{tpu_custom_call.1} parent=11 // pred_fallthru
          _
        // Predicated region
        $region25: #{tpu_custom_call.1} parent=11 // pred_check
          %p232 = pneg %p130
        $region26: #{tpu_custom_call.1} parent=11 // pred_check_branch
          %234 = sbr.rel (%p232) target = $region28
        $region27: #{tpu_custom_call.1} parent=11 // pred_region
          _
        $region28: #{tpu_custom_call.1} parent=11 // pred_fallthru
          _
        // Predicated region
        $region29: #{tpu_custom_call.1} parent=11 // pred_check
          %p235 = pneg %p151
        $region30: #{tpu_custom_call.1} parent=11 // pred_check_branch
          %237 = sbr.rel (%p235) target = $region32
        $region31: #{tpu_custom_call.1} parent=11 // pred_region
          %s239 = ssub.s32 6144, 6144
          %240 = vsyncadd [#allocation6], %s239
          %s241 = sshll.u32 [#allocation7], 4
          %s242 = int_to_ptr.vmem [resolvable:$true] %s241
          %247 = dma.hbm_to_vmem [thread:$0]  %s5, 6144, %s242, [#allocation6], 128, 128, 8
        $region32: #{tpu_custom_call.1} parent=11 // pred_fallthru
          _
        // Predicated region
        $region33: #{tpu_custom_call.1} parent=11 // pred_check
          %p248 = pneg %p172
        $region34: #{tpu_custom_call.1} parent=11 // pred_check_branch
          %250 = sbr.rel (%p248) target = $region36
        $region35: #{tpu_custom_call.1} parent=11 // pred_region
          _
        $region36: #{tpu_custom_call.1} parent=11 // pred_fallthru
          _
      $region12: #{tpu_custom_call.1} parent=5 // pred_fallthru
        _
      %p251 = scmp.lt.s32.totalorder %s20, 2
      // Predicated region
      $region37: #{tpu_custom_call.1} parent=5 // pred_check
        %p252 = pneg %p251
      $region38: #{tpu_custom_call.1} parent=5 // pred_check_branch
        %254 = sbr.rel (%p252) target = $region40
      $region39: #{tpu_custom_call.1} parent=5 // pred_region
        // Predicated region
        $region41: #{tpu_custom_call.1} parent=39 // pred_check
          %p255 = pneg %p40
        $region42: #{tpu_custom_call.1} parent=39 // pred_check_branch
          %257 = sbr.rel (%p255) target = $region44
        $region43: #{tpu_custom_call.1} parent=39 // pred_region
          %s258 = sand.u32 %s30, 1
          %s259 = scalar_lea.sflag [#allocation3], %s258
          %s260 = sand.u32 %s30, 1
          %s261 = smul.addr %s260, 16
          %s262 = scalar_lea.vmem [#allocation2], %s261
          %s264 = ssub.s32 256, 256
          %265 = vsyncadd %s259, %s264
          %s266 = smul.addr %s20, 2
          %s267 = smul.addr %s266, 128
          %s268 = scalar_lea.hbm %s0, %s267
          %s270 = sshll.u32 %s262, 4
          %s271 = int_to_ptr.vmem [resolvable:$true] %s270
          %273 = dma.hbm_to_vmem [thread:$0]  %s268, 256, %s271, %s259
        $region44: #{tpu_custom_call.1} parent=39 // pred_fallthru
          _
      $region40: #{tpu_custom_call.1} parent=5 // pred_fallthru
        _
      %p274 = scmp.le.s32.totalorder 1, %s20
      %p275 = scmp.lt.s32.totalorder %s20, 3
      %p276 = pnand %p274, %p275
      %p277 = pneg %p276
      // Predicated region
      $region45: #{tpu_custom_call.1} parent=5 // pred_check
        _
      $region46: #{tpu_custom_call.1} parent=5 // pred_check_branch
        %279 = sbr.rel (%p276) target = $region48
      $region47: #{tpu_custom_call.1} parent=5 // pred_region
        %s280 = ssub.s32 %s20, 1
        %s281 = sand.u32 %s33, 1
        %s282 = scalar_lea.sflag [#allocation3], %s281
        %s283 = sand.u32 %s33, 1
        %s284 = smul.addr %s283, 16
        %s285 = scalar_lea.vmem [#allocation2], %s284
        // Predicated region
        $region49: #{tpu_custom_call.1} parent=47 // pred_check
          %p286 = pneg %p46
        $region50: #{tpu_custom_call.1} parent=47 // pred_check_branch
          %288 = sbr.rel (%p286) target = $region52
        $region51: #{tpu_custom_call.1} parent=47 // pred_region
          %289 = dma.done %s282, 256
        $region52: #{tpu_custom_call.1} parent=47 // pred_fallthru
          _
        // Predicated region
        $region53: #{tpu_custom_call.1} parent=47 // pred_check
          %p290 = pneg %p109
        $region54: #{tpu_custom_call.1} parent=47 // pred_check_branch
          %292 = sbr.rel (%p290) target = $region56
        $region55: #{tpu_custom_call.1} parent=47 // pred_region
          %293 = dma.done [#allocation6], 6144
        $region56: #{tpu_custom_call.1} parent=47 // pred_fallthru
          _
        // Predicated region
        $region57: #{tpu_custom_call.1} parent=47 // pred_check
          %p294 = pneg %p151
        $region58: #{tpu_custom_call.1} parent=47 // pred_check_branch
          %296 = sbr.rel (%p294) target = $region60
        $region59: #{tpu_custom_call.1} parent=47 // pred_region
          %297 = dma.done [#allocation6], 6144
        $region60: #{tpu_custom_call.1} parent=47 // pred_fallthru
          _
        %s298 = sand.u32 %s33, 1
        %s299 = scalar_lea.sflag [#allocation3], %s298
        %s300 = sand.u32 %s33, 1
        %s301 = smul.addr %s300, 16
        %s302 = scalar_lea.vmem [#allocation2], %s301
        %p303 = pneg %p46
        %p304 = pneg %p43
        %p305 = pneg %p67
        %p306 = pneg %p64
        %p307 = pneg %p88
        %p308 = pneg %p85
        %p309 = pneg %p109
        %p310 = pneg %p106
        %p311 = pneg %p130
        %p312 = pneg %p127
        %p313 = pneg %p151
        %p314 = pneg %p148
        %p315 = pneg %p172
        %p316 = pneg %p169
        %p317 = pneg %p198
        %p318 = pneg %p195
        %s319 = sand.u32 %s185, 1
        %s320 = scalar_lea.sflag [#allocation4], %s319
        %s321 = sand.u32 %s185, 1
        %s322 = smul.addr %s321, 16
        %s323 = scalar_lea.vmem [#allocation8], %s322
        %v325 = vld [vmem:[%s285] sm:$0xff]
        %v326 = vld [vmem:[%s285 + $0x8] sm:$0xff]
        %v327 = vadd.f32 %v325, %v326
        %328 = vadd.xlane.f32.xlu0 %v327
        %v329 = vpop.xlane.xlu0 %328
        %v330 = vmul.f32 %v329, 0.00390625
        %v331 = vmul.f32 %v325, %v325
        %v332 = vmul.f32 %v326, %v326
        %v333 = vadd.f32 %v331, %v332
        %334 = vadd.xlane.f32.xlu0 %v333
        %v335 = vpop.xlane.xlu0 %334
        %v336 = vmul.f32 %v335, 0.00390625
        %v337 = vmul.f32 %v330, %v330
        %v338 = vsub.f32 %v336, %v337
        %v339 = vsub.f32 %v325, %v330
        %v340 = vsub.f32 %v326, %v330
        %v341 = vadd.f32 %v338, 1e-05
        %v342 = vrsqrt.pop %v341
        %v343 = vmul.f32 %v339, %v342
        %v344 = vmul.f32 %v340, %v342
        %v345 = vld [vmem:[%s1] sm:$0x3]
        %v347 = vlaneseq
        %v348 = vshrl.u32 %v347, 7
        %v349 = vsub.s32 0, %v348
        %v350 = vrot.slane %v345, %v349
        %v351 = vlaneseq
        %v352 = vshrl.u32 %v351, 7
        %v353 = vsub.s32 1, %v352
        %v354 = vrot.slane %v345, %v353
        %v357 = vmul.f32 %v343, %v350
        %v358 = vmul.f32 %v344, %v354
        %v359 = vld [vmem:[%s2] sm:$0x3]
        %v361 = vlaneseq
        %v362 = vshrl.u32 %v361, 7
        %v363 = vsub.s32 0, %v362
        %v364 = vrot.slane %v359, %v363
        %v365 = vlaneseq
        %v366 = vshrl.u32 %v365, 7
        %v367 = vsub.s32 1, %v366
        %v368 = vrot.slane %v359, %v367
        %v371 = vadd.f32 %v357, %v364
        %v372 = vadd.f32 %v358, %v368
        %v373 = vpack.c.bf16 %v371, %v371
        %v374 = vpack.c.bf16 %v372, %v372
        %v375 = vld [vmem:[#allocation5] sm:$0xff]
        %v376 = vld [vmem:[#allocation5 + $0x8] sm:$0xf]
        %v377 = vld [vmem:[#allocation5 + $0xc] sm:$0xff]
        %v378 = vld [vmem:[#allocation5 + $0x14] sm:$0xf]
        %v379 = vld [vmem:[#allocation5 + $0x18] sm:$0xff]
        %v380 = vld [vmem:[#allocation5 + $0x20] sm:$0xf]
        %v381 = vld [vmem:[#allocation5 + $0x24] sm:$0xff]
        %v382 = vld [vmem:[#allocation5 + $0x2c] sm:$0xf]
        %v383 = vld [vmem:[#allocation5 + $0x30] sm:$0xff]
        %v384 = vld [vmem:[#allocation5 + $0x38] sm:$0xf]
        %v385 = vld [vmem:[#allocation5 + $0x3c] sm:$0xff]
        %v386 = vld [vmem:[#allocation5 + $0x44] sm:$0xf]
        %v387 = vld [vmem:[#allocation5 + $0x48] sm:$0xff]
        %v388 = vld [vmem:[#allocation5 + $0x50] sm:$0xf]
        %v389 = vld [vmem:[#allocation5 + $0x54] sm:$0xff]
        %v390 = vld [vmem:[#allocation5 + $0x5c] sm:$0xf]
        %v391 = vld [vmem:[#allocation5 + $0x60] sm:$0xff]
        %v392 = vld [vmem:[#allocation5 + $0x68] sm:$0xf]
        %v393 = vld [vmem:[#allocation5 + $0x6c] sm:$0xff]
        %v394 = vld [vmem:[#allocation5 + $0x74] sm:$0xf]
        %v395 = vld [vmem:[#allocation5 + $0x78] sm:$0xff]
        %v396 = vld [vmem:[#allocation5 + $0x80] sm:$0xf]
        %v397 = vld [vmem:[#allocation5 + $0x84] sm:$0xff]
        %v398 = vld [vmem:[#allocation5 + $0x8c] sm:$0xf]
        %v399 = vld [vmem:[#allocation5 + $0x90] sm:$0xff]
        %v400 = vld [vmem:[#allocation5 + $0x98] sm:$0xf]
        %v401 = vld [vmem:[#allocation5 + $0x9c] sm:$0xff]
        %v402 = vld [vmem:[#allocation5 + $0xa4] sm:$0xf]
        %v403 = vld [vmem:[#allocation5 + $0xa8] sm:$0xff]
        %v404 = vld [vmem:[#allocation5 + $0xb0] sm:$0xf]
        %v405 = vld [vmem:[#allocation5 + $0xb4] sm:$0xff]
        %v406 = vld [vmem:[#allocation5 + $0xbc] sm:$0xf]
        %v407 = vld [vmem:[#allocation5 + $0xc0] sm:$0xff]
        %v408 = vld [vmem:[#allocation5 + $0xc8] sm:$0xf]
        %v409 = vld [vmem:[#allocation5 + $0xcc] sm:$0xff]
        %v410 = vld [vmem:[#allocation5 + $0xd4] sm:$0xf]
        %v411 = vld [vmem:[#allocation5 + $0xd8] sm:$0xff]
        %v412 = vld [vmem:[#allocation5 + $0xe0] sm:$0xf]
        %v413 = vld [vmem:[#allocation5 + $0xe4] sm:$0xff]
        %v414 = vld [vmem:[#allocation5 + $0xec] sm:$0xf]
        %v415 = vld [vmem:[#allocation5 + $0xf0] sm:$0xff]
        %v416 = vld [vmem:[#allocation5 + $0xf8] sm:$0xf]
        %v417 = vld [vmem:[#allocation5 + $0xfc] sm:$0xff]
        %v418 = vld [vmem:[#allocation5 + $0x104] sm:$0xf]
        %v419 = vld [vmem:[#allocation5 + $0x108] sm:$0xff]
        %v420 = vld [vmem:[#allocation5 + $0x110] sm:$0xf]
        %v421 = vld [vmem:[#allocation5 + $0x114] sm:$0xff]
        %v422 = vld [vmem:[#allocation5 + $0x11c] sm:$0xf]
        %v423 = vld [vmem:[#allocation5 + $0x120] sm:$0xff]
        %v424 = vld [vmem:[#allocation5 + $0x128] sm:$0xf]
        %v425 = vld [vmem:[#allocation5 + $0x12c] sm:$0xff]
        %v426 = vld [vmem:[#allocation5 + $0x134] sm:$0xf]
        %v427 = vld [vmem:[#allocation5 + $0x138] sm:$0xff]
        %v428 = vld [vmem:[#allocation5 + $0x140] sm:$0xf]
        %v429 = vld [vmem:[#allocation5 + $0x144] sm:$0xff]
        %v430 = vld [vmem:[#allocation5 + $0x14c] sm:$0xf]
        %v431 = vld [vmem:[#allocation5 + $0x150] sm:$0xff]
        %v432 = vld [vmem:[#allocation5 + $0x158] sm:$0xf]
        %v433 = vld [vmem:[#allocation5 + $0x15c] sm:$0xff]
        %v434 = vld [vmem:[#allocation5 + $0x164] sm:$0xf]
        %v435 = vld [vmem:[#allocation5 + $0x168] sm:$0xff]
        %v436 = vld [vmem:[#allocation5 + $0x170] sm:$0xf]
        %v437 = vld [vmem:[#allocation5 + $0x174] sm:$0xff]
        %v438 = vld [vmem:[#allocation5 + $0x17c] sm:$0xf]
        %v439 = vld [vmem:[%s4] sm:$0x7]
        %v441 = vlaneseq
        %v442 = vshrl.u32 %v441, 7
        %v443 = vsub.s32 0, %v442
        %v444 = vrot.slane %v439, %v443
        %v445 = vlaneseq
        %v446 = vshrl.u32 %v445, 7
        %v447 = vsub.s32 1, %v446
        %v448 = vrot.slane %v439, %v447
        %v449 = vlaneseq
        %v450 = vshrl.u32 %v449, 7
        %v451 = vsub.s32 2, %v450
        %v452 = vrot.slane %v439, %v451
        %v520 = vunpack.c.l.b16 %v375
        %v521 = vunpack.c.h.b16 %v375
        %v522 = vunpack.c.l.b16 %v376
        %v523 = vunpack.c.l.b16 %v377
        %v524 = vunpack.c.h.b16 %v377
        %v525 = vunpack.c.l.b16 %v378
        %v526 = vunpack.c.l.b16 %v379
        %v527 = vunpack.c.h.b16 %v379
        %v528 = vunpack.c.l.b16 %v380
        %v529 = vunpack.c.l.b16 %v381
        %v530 = vunpack.c.h.b16 %v381
        %v531 = vunpack.c.l.b16 %v382
        %v532 = vunpack.c.l.b16 %v383
        %v533 = vunpack.c.h.b16 %v383
        %v534 = vunpack.c.l.b16 %v384
        %v535 = vunpack.c.l.b16 %v385
        %v536 = vunpack.c.h.b16 %v385
        %v537 = vunpack.c.l.b16 %v386
        %v538 = vunpack.c.l.b16 %v387
        %v539 = vunpack.c.h.b16 %v387
        %v540 = vunpack.c.l.b16 %v388
        %v541 = vunpack.c.l.b16 %v389
        %v542 = vunpack.c.h.b16 %v389
        %v543 = vunpack.c.l.b16 %v390
        %v544 = vunpack.c.l.b16 %v391
        %v545 = vunpack.c.h.b16 %v391
        %v546 = vunpack.c.l.b16 %v392
        %v547 = vunpack.c.l.b16 %v393
        %v548 = vunpack.c.h.b16 %v393
        %v549 = vunpack.c.l.b16 %v394
        %v550 = vunpack.c.l.b16 %v395
        %v551 = vunpack.c.h.b16 %v395
        %v552 = vunpack.c.l.b16 %v396
        %v553 = vunpack.c.l.b16 %v397
        %v554 = vunpack.c.h.b16 %v397
        %v555 = vunpack.c.l.b16 %v398
        %v556 = vunpack.c.l.b16 %v399
        %v557 = vunpack.c.h.b16 %v399
        %v558 = vunpack.c.l.b16 %v400
        %v559 = vunpack.c.l.b16 %v401
        %v560 = vunpack.c.h.b16 %v401
        %v561 = vunpack.c.l.b16 %v402
        %v562 = vunpack.c.l.b16 %v403
        %v563 = vunpack.c.h.b16 %v403
        %v564 = vunpack.c.l.b16 %v404
        %v565 = vunpack.c.l.b16 %v405
        %v566 = vunpack.c.h.b16 %v405
        %v567 = vunpack.c.l.b16 %v406
        %v568 = vunpack.c.l.b16 %v407
        %v569 = vunpack.c.h.b16 %v407
        %v570 = vunpack.c.l.b16 %v408
        %v571 = vunpack.c.l.b16 %v409
        %v572 = vunpack.c.h.b16 %v409
        %v573 = vunpack.c.l.b16 %v410
        %v574 = vunpack.c.l.b16 %v411
        %v575 = vunpack.c.h.b16 %v411
        %v576 = vunpack.c.l.b16 %v412
        %v577 = vunpack.c.l.b16 %v413
        %v578 = vunpack.c.h.b16 %v413
        %v579 = vunpack.c.l.b16 %v414
        %v580 = vunpack.c.l.b16 %v415
        %v581 = vunpack.c.h.b16 %v415
        %v582 = vunpack.c.l.b16 %v416
        %v583 = vunpack.c.l.b16 %v417
        %v584 = vunpack.c.h.b16 %v417
        %v585 = vunpack.c.l.b16 %v418
        %v586 = vunpack.c.l.b16 %v419
        %v587 = vunpack.c.h.b16 %v419
        %v588 = vunpack.c.l.b16 %v420
        %v589 = vunpack.c.l.b16 %v421
        %v590 = vunpack.c.h.b16 %v421
        %v591 = vunpack.c.l.b16 %v422
        %v592 = vunpack.c.l.b16 %v423
        %v593 = vunpack.c.h.b16 %v423
        %v594 = vunpack.c.l.b16 %v424
        %v595 = vunpack.c.l.b16 %v425
        %v596 = vunpack.c.h.b16 %v425
        %v597 = vunpack.c.l.b16 %v426
        %v598 = vunpack.c.l.b16 %v427
        %v599 = vunpack.c.h.b16 %v427
        %v600 = vunpack.c.l.b16 %v428
        %v601 = vunpack.c.l.b16 %v429
        %v602 = vunpack.c.h.b16 %v429
        %v603 = vunpack.c.l.b16 %v430
        %v604 = vunpack.c.l.b16 %v431
        %v605 = vunpack.c.h.b16 %v431
        %v606 = vunpack.c.l.b16 %v432
        %v607 = vunpack.c.l.b16 %v433
        %v608 = vunpack.c.h.b16 %v433
        %v609 = vunpack.c.l.b16 %v434
        %v610 = vunpack.c.l.b16 %v435
        %v611 = vunpack.c.h.b16 %v435
        %v612 = vunpack.c.l.b16 %v436
        %v613 = vunpack.c.l.b16 %v437
        %v614 = vunpack.c.h.b16 %v437
        %v615 = vunpack.c.l.b16 %v438
        %v616 = vpack.c.b16 %v523, %v520
        %v617 = vpack.c.b16 %v524, %v521
        %v618 = vpack.c.b16 %v525, %v522
        %v619 = vpack.c.b16 %v529, %v526
        %v620 = vpack.c.b16 %v530, %v527
        %v621 = vpack.c.b16 %v531, %v528
        %v622 = vpack.c.b16 %v535, %v532
        %v623 = vpack.c.b16 %v536, %v533
        %v624 = vpack.c.b16 %v537, %v534
        %v625 = vpack.c.b16 %v541, %v538
        %v626 = vpack.c.b16 %v542, %v539
        %v627 = vpack.c.b16 %v543, %v540
        %v628 = vpack.c.b16 %v547, %v544
        %v629 = vpack.c.b16 %v548, %v545
        %v630 = vpack.c.b16 %v549, %v546
        %v631 = vpack.c.b16 %v553, %v550
        %v632 = vpack.c.b16 %v554, %v551
        %v633 = vpack.c.b16 %v555, %v552
        %v634 = vpack.c.b16 %v559, %v556
        %v635 = vpack.c.b16 %v560, %v557
        %v636 = vpack.c.b16 %v561, %v558
        %v637 = vpack.c.b16 %v565, %v562
        %v638 = vpack.c.b16 %v566, %v563
        %v639 = vpack.c.b16 %v567, %v564
        %v640 = vpack.c.b16 %v571, %v568
        %v641 = vpack.c.b16 %v572, %v569
        %v642 = vpack.c.b16 %v573, %v570
        %v643 = vpack.c.b16 %v577, %v574
        %v644 = vpack.c.b16 %v578, %v575
        %v645 = vpack.c.b16 %v579, %v576
        %v646 = vpack.c.b16 %v583, %v580
        %v647 = vpack.c.b16 %v584, %v581
        %v648 = vpack.c.b16 %v585, %v582
        %v649 = vpack.c.b16 %v589, %v586
        %v650 = vpack.c.b16 %v590, %v587
        %v651 = vpack.c.b16 %v591, %v588
        %v652 = vpack.c.b16 %v595, %v592
        %v653 = vpack.c.b16 %v596, %v593
        %v654 = vpack.c.b16 %v597, %v594
        %v655 = vpack.c.b16 %v601, %v598
        %v656 = vpack.c.b16 %v602, %v599
        %v657 = vpack.c.b16 %v603, %v600
        %v658 = vpack.c.b16 %v607, %v604
        %v659 = vpack.c.b16 %v608, %v605
        %v660 = vpack.c.b16 %v609, %v606
        %v661 = vpack.c.b16 %v613, %v610
        %v662 = vpack.c.b16 %v614, %v611
        %v663 = vpack.c.b16 %v615, %v612
        %712 = vmatprep.subr.bf16.mxu0 %v617
        %713 = vmatpush1.bf16.msra.mxu0 %v616
        %714 = vmatprep.subr.bf16.mxu0 %v620
        %715 = vmatpush1.bf16.msra.mxu0 %v619
        %716 = vmatprep.subr.bf16.mxu0 %v623
        %717 = vmatpush1.bf16.msra.mxu0 %v622
        %718 = vmatprep.subr.bf16.mxu0 %v626
        %719 = vmatpush1.bf16.msra.mxu0 %v625
        %720 = vmatprep.subr.bf16.mxu0 %v629
        %721 = vmatpush1.bf16.msra.mxu0 %v628
        %722 = vmatprep.subr.bf16.mxu0 %v632
        %723 = vmatpush1.bf16.msra.mxu0 %v631
        %724 = vmatprep.subr.bf16.mxu0 %v635
        %725 = vmatpush1.bf16.msra.mxu0 %v634
        %726 = vmatprep.subr.bf16.mxu0 %v638
        %727 = vmatpush1.bf16.msra.mxu0 %v637
        %728 = vmatprep.subr.bf16.mxu0 %v641
        %729 = vmatpush1.bf16.msra.mxu0 %v640
        %730 = vmatprep.subr.bf16.mxu0 %v644
        %731 = vmatpush1.bf16.msra.mxu0 %v643
        %732 = vmatprep.subr.bf16.mxu0 %v647
        %733 = vmatpush1.bf16.msra.mxu0 %v646
        %734 = vmatprep.subr.bf16.mxu0 %v650
        %735 = vmatpush1.bf16.msra.mxu0 %v649
        %736 = vmatprep.subr.bf16.mxu0 %v653
        %737 = vmatpush1.bf16.msra.mxu0 %v652
        %738 = vmatprep.subr.bf16.mxu0 %v656
        %739 = vmatpush1.bf16.msra.mxu0 %v655
        %740 = vmatprep.subr.bf16.mxu0 %v659
        %741 = vmatpush1.bf16.msra.mxu0 %v658
        %742 = vmatprep.subr.bf16.mxu0 %v662
        %743 = vmatpush1.bf16.msra.mxu0 %v661
        %744 = vmatprep.mubr.bf16.mxu0 %v374
        %745 = vmatmul.mubr.bf16.gmra.mrb[0].mxu0 %v373
        %v746 = vpop.f32.mrb[0].mxu0
        %v747 = vadd.f32 %v444, %v746
        %v748 = vpop.f32.mrb[0].mxu0
        %v749 = vadd.f32 %v448, %v748
        %v750 = vpop.f32.mrb[0].mxu0
        %v751 = vpop.f32.mrb[0].mxu0
        %752 = vdwg.mxu0
        %753 = vmatprep.subr.bf16.mxu0 0
        %754 = vmatpush1.bf16.msra.mxu0 %v618
        %755 = vmatprep.subr.bf16.mxu0 0
        %756 = vmatpush1.bf16.msra.mxu0 %v621
        %757 = vmatprep.subr.bf16.mxu0 0
        %758 = vmatpush1.bf16.msra.mxu0 %v624
        %759 = vmatprep.subr.bf16.mxu0 0
        %760 = vmatpush1.bf16.msra.mxu0 %v627
        %761 = vmatprep.subr.bf16.mxu0 0
        %762 = vmatpush1.bf16.msra.mxu0 %v630
        %763 = vmatprep.subr.bf16.mxu0 0
        %764 = vmatpush1.bf16.msra.mxu0 %v633
        %765 = vmatprep.subr.bf16.mxu0 0
        %766 = vmatpush1.bf16.msra.mxu0 %v636
        %767 = vmatprep.subr.bf16.mxu0 0
        %768 = vmatpush1.bf16.msra.mxu0 %v639
        %769 = vmatprep.subr.bf16.mxu0 0
        %770 = vmatpush1.bf16.msra.mxu0 %v642
        %771 = vmatprep.subr.bf16.mxu0 0
        %772 = vmatpush1.bf16.msra.mxu0 %v645
        %773 = vmatprep.subr.bf16.mxu0 0
        %774 = vmatpush1.bf16.msra.mxu0 %v648
        %775 = vmatprep.subr.bf16.mxu0 0
        %776 = vmatpush1.bf16.msra.mxu0 %v651
        %777 = vmatprep.subr.bf16.mxu0 0
        %778 = vmatpush1.bf16.msra.mxu0 %v654
        %779 = vmatprep.subr.bf16.mxu0 0
        %780 = vmatpush1.bf16.msra.mxu0 %v657
        %781 = vmatprep.subr.bf16.mxu0 0
        %782 = vmatpush1.bf16.msra.mxu0 %v660
        %783 = vmatprep.subr.bf16.mxu0 0
        %784 = vmatpush1.bf16.msra.mxu0 %v663
        %785 = vmatprep.mubr.bf16.mxu0 %v374
        %786 = vmatmul.mubr.bf16.gmra.mrb[0].mxu0 %v373
        %v787 = vpop.f32.mrb[0].mxu0
        %v788 = vadd.f32 %v452, %v787
        %v789 = vpop.f32.mrb[0].mxu0
        %v790 = vpop.f32.mrb[0].mxu0
        %v791 = vpop.f32.mrb[0].mxu0
        %792 = vdwg.mxu0
        %v793 = vmax.f32 %v747, 0.0
        %v794 = vmax.f32 %v749, 0.0
        %v795 = vmax.f32 %v788, 0.0
        %v796 = vpack.c.bf16 %v793, %v793
        %v797 = vpack.c.bf16 %v794, %v794
        %v798 = vpack.c.bf16 %v795, %v795
        %v799 = vld [vmem:[#allocation7] sm:$0xff]
        %v800 = vld [vmem:[#allocation7 + $0x8] sm:$0xff]
        %v801 = vld [vmem:[#allocation7 + $0x10] sm:$0xff]
        %v802 = vld [vmem:[#allocation7 + $0x18] sm:$0xff]
        %v803 = vld [vmem:[#allocation7 + $0x20] sm:$0xff]
        %v804 = vld [vmem:[#allocation7 + $0x28] sm:$0xff]
        %v805 = vld [vmem:[#allocation7 + $0x30] sm:$0xff]
        %v806 = vld [vmem:[#allocation7 + $0x38] sm:$0xff]
        %v807 = vld [vmem:[#allocation7 + $0x40] sm:$0xff]
        %v808 = vld [vmem:[#allocation7 + $0x48] sm:$0xff]
        %v809 = vld [vmem:[#allocation7 + $0x50] sm:$0xff]
        %v810 = vld [vmem:[#allocation7 + $0x58] sm:$0xff]
        %v811 = vld [vmem:[#allocation7 + $0x60] sm:$0xff]
        %v812 = vld [vmem:[#allocation7 + $0x68] sm:$0xff]
        %v813 = vld [vmem:[#allocation7 + $0x70] sm:$0xff]
        %v814 = vld [vmem:[#allocation7 + $0x78] sm:$0xff]
        %v815 = vld [vmem:[#allocation7 + $0x80] sm:$0xff]
        %v816 = vld [vmem:[#allocation7 + $0x88] sm:$0xff]
        %v817 = vld [vmem:[#allocation7 + $0x90] sm:$0xff]
        %v818 = vld [vmem:[#allocation7 + $0x98] sm:$0xff]
        %v819 = vld [vmem:[#allocation7 + $0xa0] sm:$0xff]
        %v820 = vld [vmem:[#allocation7 + $0xa8] sm:$0xff]
        %v821 = vld [vmem:[#allocation7 + $0xb0] sm:$0xff]
        %v822 = vld [vmem:[#allocation7 + $0xb8] sm:$0xff]
        %v823 = vld [vmem:[#allocation7 + $0xc0] sm:$0xff]
        %v824 = vld [vmem:[#allocation7 + $0xc8] sm:$0xff]
        %v825 = vld [vmem:[#allocation7 + $0xd0] sm:$0xff]
        %v826 = vld [vmem:[#allocation7 + $0xd8] sm:$0xff]
        %v827 = vld [vmem:[#allocation7 + $0xe0] sm:$0xff]
        %v828 = vld [vmem:[#allocation7 + $0xe8] sm:$0xff]
        %v829 = vld [vmem:[#allocation7 + $0xf0] sm:$0xff]
        %v830 = vld [vmem:[#allocation7 + $0xf8] sm:$0xff]
        %v831 = vld [vmem:[#allocation7 + $0x100] sm:$0xff]
        %v832 = vld [vmem:[#allocation7 + $0x108] sm:$0xff]
        %v833 = vld [vmem:[#allocation7 + $0x110] sm:$0xff]
        %v834 = vld [vmem:[#allocation7 + $0x118] sm:$0xff]
        %v835 = vld [vmem:[#allocation7 + $0x120] sm:$0xff]
        %v836 = vld [vmem:[#allocation7 + $0x128] sm:$0xff]
        %v837 = vld [vmem:[#allocation7 + $0x130] sm:$0xff]
        %v838 = vld [vmem:[#allocation7 + $0x138] sm:$0xff]
        %v839 = vld [vmem:[#allocation7 + $0x140] sm:$0xff]
        %v840 = vld [vmem:[#allocation7 + $0x148] sm:$0xff]
        %v841 = vld [vmem:[#allocation7 + $0x150] sm:$0xff]
        %v842 = vld [vmem:[#allocation7 + $0x158] sm:$0xff]
        %v843 = vld [vmem:[#allocation7 + $0x160] sm:$0xff]
        %v844 = vld [vmem:[#allocation7 + $0x168] sm:$0xff]
        %v845 = vld [vmem:[#allocation7 + $0x170] sm:$0xff]
        %v846 = vld [vmem:[#allocation7 + $0x178] sm:$0xff]
        %v847 = vld [vmem:[%s6] sm:$0x3]
        %v849 = vlaneseq
        %v850 = vshrl.u32 %v849, 7
        %v851 = vsub.s32 0, %v850
        %v852 = vrot.slane %v847, %v851
        %v853 = vlaneseq
        %v854 = vshrl.u32 %v853, 7
        %v855 = vsub.s32 1, %v854
        %v856 = vrot.slane %v847, %v855
        %v907 = vunpack.c.l.b16 %v799
        %v908 = vunpack.c.h.b16 %v799
        %v909 = vunpack.c.l.b16 %v800
        %v910 = vunpack.c.h.b16 %v800
        %v911 = vunpack.c.l.b16 %v801
        %v912 = vunpack.c.h.b16 %v801
        %v913 = vunpack.c.l.b16 %v802
        %v914 = vunpack.c.h.b16 %v802
        %v915 = vunpack.c.l.b16 %v803
        %v916 = vunpack.c.h.b16 %v803
        %v917 = vunpack.c.l.b16 %v804
        %v918 = vunpack.c.h.b16 %v804
        %v919 = vunpack.c.l.b16 %v805
        %v920 = vunpack.c.h.b16 %v805
        %v921 = vunpack.c.l.b16 %v806
        %v922 = vunpack.c.h.b16 %v806
        %v923 = vunpack.c.l.b16 %v807
        %v924 = vunpack.c.h.b16 %v807
        %v925 = vunpack.c.l.b16 %v808
        %v926 = vunpack.c.h.b16 %v808
        %v927 = vunpack.c.l.b16 %v809
        %v928 = vunpack.c.h.b16 %v809
        %v929 = vunpack.c.l.b16 %v810
        %v930 = vunpack.c.h.b16 %v810
        %v931 = vunpack.c.l.b16 %v811
        %v932 = vunpack.c.h.b16 %v811
        %v933 = vunpack.c.l.b16 %v812
        %v934 = vunpack.c.h.b16 %v812
        %v935 = vunpack.c.l.b16 %v813
        %v936 = vunpack.c.h.b16 %v813
        %v937 = vunpack.c.l.b16 %v814
        %v938 = vunpack.c.h.b16 %v814
        %v939 = vunpack.c.l.b16 %v815
        %v940 = vunpack.c.h.b16 %v815
        %v941 = vunpack.c.l.b16 %v816
        %v942 = vunpack.c.h.b16 %v816
        %v943 = vunpack.c.l.b16 %v817
        %v944 = vunpack.c.h.b16 %v817
        %v945 = vunpack.c.l.b16 %v818
        %v946 = vunpack.c.h.b16 %v818
        %v947 = vunpack.c.l.b16 %v819
        %v948 = vunpack.c.h.b16 %v819
        %v949 = vunpack.c.l.b16 %v820
        %v950 = vunpack.c.h.b16 %v820
        %v951 = vunpack.c.l.b16 %v821
        %v952 = vunpack.c.h.b16 %v821
        %v953 = vunpack.c.l.b16 %v822
        %v954 = vunpack.c.h.b16 %v822
        %v955 = vunpack.c.l.b16 %v823
        %v956 = vunpack.c.h.b16 %v823
        %v957 = vunpack.c.l.b16 %v824
        %v958 = vunpack.c.h.b16 %v824
        %v959 = vunpack.c.l.b16 %v825
        %v960 = vunpack.c.h.b16 %v825
        %v961 = vunpack.c.l.b16 %v826
        %v962 = vunpack.c.h.b16 %v826
        %v963 = vunpack.c.l.b16 %v827
        %v964 = vunpack.c.h.b16 %v827
        %v965 = vunpack.c.l.b16 %v828
        %v966 = vunpack.c.h.b16 %v828
        %v967 = vunpack.c.l.b16 %v829
        %v968 = vunpack.c.h.b16 %v829
        %v969 = vunpack.c.l.b16 %v830
        %v970 = vunpack.c.h.b16 %v830
        %v971 = vunpack.c.l.b16 %v831
        %v972 = vunpack.c.h.b16 %v831
        %v973 = vunpack.c.l.b16 %v832
        %v974 = vunpack.c.h.b16 %v832
        %v975 = vunpack.c.l.b16 %v833
        %v976 = vunpack.c.h.b16 %v833
        %v977 = vunpack.c.l.b16 %v834
        %v978 = vunpack.c.h.b16 %v834
        %v979 = vunpack.c.l.b16 %v835
        %v980 = vunpack.c.h.b16 %v835
        %v981 = vunpack.c.l.b16 %v836
        %v982 = vunpack.c.h.b16 %v836
        %v983 = vunpack.c.l.b16 %v837
        %v984 = vunpack.c.h.b16 %v837
        %v985 = vunpack.c.l.b16 %v838
        %v986 = vunpack.c.h.b16 %v838
        %v987 = vunpack.c.l.b16 %v839
        %v988 = vunpack.c.h.b16 %v839
        %v989 = vunpack.c.l.b16 %v840
        %v990 = vunpack.c.h.b16 %v840
        %v991 = vunpack.c.l.b16 %v841
        %v992 = vunpack.c.h.b16 %v841
        %v993 = vunpack.c.l.b16 %v842
        %v994 = vunpack.c.h.b16 %v842
        %v995 = vunpack.c.l.b16 %v843
        %v996 = vunpack.c.h.b16 %v843
        %v997 = vunpack.c.l.b16 %v844
        %v998 = vunpack.c.h.b16 %v844
        %v999 = vunpack.c.l.b16 %v845
        %v1000 = vunpack.c.h.b16 %v845
        %v1001 = vunpack.c.l.b16 %v846
        %v1002 = vunpack.c.h.b16 %v846
        %v1003 = vpack.c.b16 %v909, %v907
        %v1004 = vpack.c.b16 %v910, %v908
        %v1005 = vpack.c.b16 %v913, %v911
        %v1006 = vpack.c.b16 %v914, %v912
        %v1007 = vpack.c.b16 %v917, %v915
        %v1008 = vpack.c.b16 %v918, %v916
        %v1009 = vpack.c.b16 %v921, %v919
        %v1010 = vpack.c.b16 %v922, %v920
        %v1011 = vpack.c.b16 %v925, %v923
        %v1012 = vpack.c.b16 %v926, %v924
        %v1013 = vpack.c.b16 %v929, %v927
        %v1014 = vpack.c.b16 %v930, %v928
        %v1015 = vpack.c.b16 %v933, %v931
        %v1016 = vpack.c.b16 %v934, %v932
        %v1017 = vpack.c.b16 %v937, %v935
        %v1018 = vpack.c.b16 %v938, %v936
        %v1019 = vpack.c.b16 %v941, %v939
        %v1020 = vpack.c.b16 %v942, %v940
        %v1021 = vpack.c.b16 %v945, %v943
        %v1022 = vpack.c.b16 %v946, %v944
        %v1023 = vpack.c.b16 %v949, %v947
        %v1024 = vpack.c.b16 %v950, %v948
        %v1025 = vpack.c.b16 %v953, %v951
        %v1026 = vpack.c.b16 %v954, %v952
        %v1027 = vpack.c.b16 %v957, %v955
        %v1028 = vpack.c.b16 %v958, %v956
        %v1029 = vpack.c.b16 %v961, %v959
        %v1030 = vpack.c.b16 %v962, %v960
        %v1031 = vpack.c.b16 %v965, %v963
        %v1032 = vpack.c.b16 %v966, %v964
        %v1033 = vpack.c.b16 %v969, %v967
        %v1034 = vpack.c.b16 %v970, %v968
        %v1035 = vpack.c.b16 %v973, %v971
        %v1036 = vpack.c.b16 %v974, %v972
        %v1037 = vpack.c.b16 %v977, %v975
        %v1038 = vpack.c.b16 %v978, %v976
        %v1039 = vpack.c.b16 %v981, %v979
        %v1040 = vpack.c.b16 %v982, %v980
        %v1041 = vpack.c.b16 %v985, %v983
        %v1042 = vpack.c.b16 %v986, %v984
        %v1043 = vpack.c.b16 %v989, %v987
        %v1044 = vpack.c.b16 %v990, %v988
        %v1045 = vpack.c.b16 %v993, %v991
        %v1046 = vpack.c.b16 %v994, %v992
        %v1047 = vpack.c.b16 %v997, %v995
        %v1048 = vpack.c.b16 %v998, %v996
        %v1049 = vpack.c.b16 %v1001, %v999
        %v1050 = vpack.c.b16 %v1002, %v1000
        %1099 = vmatprep.subr.bf16.mxu0 %v1004
        %1100 = vmatpush1.bf16.msra.mxu0 %v1003
        %1101 = vmatprep.subr.bf16.mxu0 %v1006
        %1102 = vmatpush1.bf16.msra.mxu0 %v1005
        %1103 = vmatprep.subr.bf16.mxu0 %v1008
        %1104 = vmatpush1.bf16.msra.mxu0 %v1007
        %1105 = vmatprep.subr.bf16.mxu0 %v1010
        %1106 = vmatpush1.bf16.msra.mxu0 %v1009
        %1107 = vmatprep.subr.bf16.mxu0 %v1012
        %1108 = vmatpush1.bf16.msra.mxu0 %v1011
        %1109 = vmatprep.subr.bf16.mxu0 %v1014
        %1110 = vmatpush1.bf16.msra.mxu0 %v1013
        %1111 = vmatprep.subr.bf16.mxu0 %v1016
        %1112 = vmatpush1.bf16.msra.mxu0 %v1015
        %1113 = vmatprep.subr.bf16.mxu0 %v1018
        %1114 = vmatpush1.bf16.msra.mxu0 %v1017
        %1115 = vmatprep.subr.bf16.mxu0 %v1020
        %1116 = vmatpush1.bf16.msra.mxu0 %v1019
        %1117 = vmatprep.subr.bf16.mxu0 %v1022
        %1118 = vmatpush1.bf16.msra.mxu0 %v1021
        %1119 = vmatprep.subr.bf16.mxu0 %v1024
        %1120 = vmatpush1.bf16.msra.mxu0 %v1023
        %1121 = vmatprep.subr.bf16.mxu0 %v1026
        %1122 = vmatpush1.bf16.msra.mxu0 %v1025
        %1123 = vmatprep.subr.bf16.mxu0 %v1028
        %1124 = vmatpush1.bf16.msra.mxu0 %v1027
        %1125 = vmatprep.subr.bf16.mxu0 %v1030
        %1126 = vmatpush1.bf16.msra.mxu0 %v1029
        %1127 = vmatprep.subr.bf16.mxu0 %v1032
        %1128 = vmatpush1.bf16.msra.mxu0 %v1031
        %1129 = vmatprep.subr.bf16.mxu0 %v1034
        %1130 = vmatpush1.bf16.msra.mxu0 %v1033
        %1131 = vmatprep.mubr.bf16.mxu0 %v797
        %1132 = vmatmul.mubr.bf16.gmra.mrb[0].mxu0 %v796
        %v1133 = vpop.f32.mrb[0].mxu0
        %v1134 = vadd.f32 %v852, %v1133
        %v1135 = vpop.f32.mrb[0].mxu0
        %v1136 = vadd.f32 %v856, %v1135
        %v1137 = vpop.f32.mrb[0].mxu0
        %v1138 = vpop.f32.mrb[0].mxu0
        %1139 = vdwg.mxu0
        %1140 = vmatprep.subr.bf16.mxu0 %v1036
        %1141 = vmatpush1.bf16.msra.mxu0 %v1035
        %1142 = vmatprep.subr.bf16.mxu0 %v1038
        %1143 = vmatpush1.bf16.msra.mxu0 %v1037
        %1144 = vmatprep.subr.bf16.mxu0 %v1040
        %1145 = vmatpush1.bf16.msra.mxu0 %v1039
        %1146 = vmatprep.subr.bf16.mxu0 %v1042
        %1147 = vmatpush1.bf16.msra.mxu0 %v1041
        %1148 = vmatprep.subr.bf16.mxu0 %v1044
        %1149 = vmatpush1.bf16.msra.mxu0 %v1043
        %1150 = vmatprep.subr.bf16.mxu0 %v1046
        %1151 = vmatpush1.bf16.msra.mxu0 %v1045
        %1152 = vmatprep.subr.bf16.mxu0 %v1048
        %1153 = vmatpush1.bf16.msra.mxu0 %v1047
        %1154 = vmatprep.subr.bf16.mxu0 %v1050
        %1155 = vmatpush1.bf16.msra.mxu0 %v1049
        %1156 = vmatprep.subr.bf16.mxu0 0
        %1157 = vmatpush1.bf16.msra.mxu0 0
        %1158 = vmatprep.subr.bf16.mxu0 0
        %1159 = vmatpush1.bf16.msra.mxu0 0
        %1160 = vmatprep.subr.bf16.mxu0 0
        %1161 = vmatpush1.bf16.msra.mxu0 0
        %1162 = vmatprep.subr.bf16.mxu0 0
        %1163 = vmatpush1.bf16.msra.mxu0 0
        %1164 = vmatprep.subr.bf16.mxu0 0
        %1165 = vmatpush1.bf16.msra.mxu0 0
        %1166 = vmatprep.subr.bf16.mxu0 0
        %1167 = vmatpush1.bf16.msra.mxu0 0
        %1168 = vmatprep.subr.bf16.mxu0 0
        %1169 = vmatpush1.bf16.msra.mxu0 0
        %1170 = vmatprep.subr.bf16.mxu0 0
        %1171 = vmatpush1.bf16.msra.mxu0 0
        %1172 = vmatprep.mubr.bf16.mxu0 0
        %1173 = vmatmul.mubr.bf16.gmra.mrb[0].mxu0 %v798
        %v1174 = vpop.f32.mrb[0].mxu0
        %v1175 = vadd.f32 %v1134, %v1174
        %v1176 = vpop.f32.mrb[0].mxu0
        %v1177 = vadd.f32 %v1136, %v1176
        %v1178 = vpop.f32.mrb[0].mxu0
        %v1179 = vpop.f32.mrb[0].mxu0
        %1180 = vdwg.mxu0
        %v1181 = vadd.f32 %v1175, %v325
        %v1182 = vadd.f32 %v1177, %v326
        %1183 = vst [vmem:[%s323] sm:$0xff] %v1181
        %1184 = vst [vmem:[%s323 + $0x8] sm:$0xff] %v1182
        %s1185 = sand.u32 %s185, 1
        %s1186 = scalar_lea.sflag [#allocation4], %s1185
        %s1187 = sand.u32 %s185, 1
        %s1188 = smul.addr %s1187, 16
        %s1189 = scalar_lea.vmem [#allocation8], %s1188
        // Predicated region
        $region61: #{tpu_custom_call.1} parent=47 // pred_check
          %p1190 = pneg %p195
        $region62: #{tpu_custom_call.1} parent=47 // pred_check_branch
          %1192 = sbr.rel (%p1190) target = $region64
        $region63: #{tpu_custom_call.1} parent=47 // pred_region
          %s1194 = ssub.s32 256, 256
          %1195 = vsyncadd %s1186, %s1194
          %s1196 = smul.addr %s25, 2
          %s1197 = smul.addr %s1196, 128
          %s1198 = scalar_lea.hbm %s7, %s1197
          %s1200 = sshll.u32 %s1189, 4
          %s1201 = int_to_ptr.vmem [resolvable:$true] %s1200
          %1203 = dma.vmem_to_hbm [thread:$0]  %s1201, 256, %s1198, %s1186
        $region64: #{tpu_custom_call.1} parent=47 // pred_fallthru
          _
      $region48: #{tpu_custom_call.1} parent=5 // pred_fallthru
        _
      %p1204 = scmp.le.s32.totalorder 2, %s20
      // Predicated region
      $region65: #{tpu_custom_call.1} parent=5 // pred_check
        %p1205 = pneg %p1204
      $region66: #{tpu_custom_call.1} parent=5 // pred_check_branch
        %1207 = sbr.rel (%p1205) target = $region68
      $region67: #{tpu_custom_call.1} parent=5 // pred_region
        %s1208 = ssub.s32 %s20, 2
        // Predicated region
        $region69: #{tpu_custom_call.1} parent=67 // pred_check
          %p1209 = pneg %p201
        $region70: #{tpu_custom_call.1} parent=67 // pred_check_branch
          %1211 = sbr.rel (%p1209) target = $region72
        $region71: #{tpu_custom_call.1} parent=67 // pred_region
          %s1212 = sand.u32 %s186, 1
          %s1213 = scalar_lea.sflag [#allocation4], %s1212
          %s1214 = sand.u32 %s186, 1
          %s1215 = smul.addr %s1214, 16
          %s1216 = scalar_lea.vmem [#allocation8], %s1215
          %1217 = dma.done %s1213, 256
        $region72: #{tpu_custom_call.1} parent=67 // pred_fallthru
          _
      $region68: #{tpu_custom_call.1} parent=5 // pred_fallthru
        _
    $region6: #{tpu_custom_call.1} parent=1 // loop_footer
      %s24 = sadd.s32 1, %s20
    $region7: #{tpu_custom_call.1} parent=1 // loop_footer_branch
      %19 = sbr.rel target = $region3
    $region8: #{tpu_custom_call.1} parent=1 // loop_exit
      _
    %1218 = vsyncpa [#allocation3], 1
    %s1219 = scalar_lea.sflag [#allocation3], 1
    %1220 = vsyncpa %s1219, 1
    %1221 = vsyncpa [#allocation6], 1
    %1222 = vsyncpa [#allocation4], 1
    %s1223 = scalar_lea.sflag [#allocation4], 1
    %1224 = vsyncpa %s1223, 1

</llo_original>
